<compile_context>
chip_gen: v6e
topology: v6e:2x2x1
jax: 0.10.0
libtpu: 0.0.40
codegen_flags: <defaults>
</compile_context>

<pallas_src>
import functools

import jax
import jax.numpy as jnp
from jax.experimental import pallas as pl
from jax.experimental.pallas import tpu as pltpu

LANE = 128


def _round_up(v, m):
    return ((v + m - 1) // m) * m


# ---------------------------------------------------------------------------
# Fused kernel: L x (SAGEConv + ReLU) with in-VMEM layer-to-layer hidden state
# and fused global_add_pool partials.  Grid = (layer, dst-row tile, src/K tile).
# ---------------------------------------------------------------------------
def _fused_sage_kernel(x_ref, adj_ref, dinv_ref, wl_ref, wr_ref, b_ref, pool_ref,
                       pooled_ref, acc_ref, h_scr, *, N, tm, tk):
    l = pl.program_id(0)
    i = pl.program_id(1)
    k = pl.program_id(2)

    # One-time: bring padded input features into ping-pong slot 0 (rows [0, N)).
    @pl.when((l == 0) & (i == 0) & (k == 0))
    def _():
        h_scr[0:N, :] = x_ref[...]

    @pl.when(k == 0)
    def _():
        acc_ref[...] = jnp.zeros_like(acc_ref)

    src = l % 2            # slot holding this layer's input features
    dst = 1 - src          # slot receiving this layer's output features

    # Neighbor-count aggregation for this (row tile, K tile): int8 counts -> bf16 MXU,
    # f32 accumulation.  h source rows come from VMEM (never re-streamed from HBM).
    koff = pl.multiple_of(src * N + k * tk, tk)
    h_blk = h_scr[pl.ds(koff, tk), :]
    acc_ref[...] += jnp.dot(adj_ref[...].astype(jnp.bfloat16), h_blk,
                            preferred_element_type=jnp.float32)

    @pl.when(k == pl.num_programs(2) - 1)
    def _():
        # Exact mean aggregation: per-destination-row 1/deg applied once in f32.
        agg = acc_ref[...] * dinv_ref[...]
        ioff = pl.multiple_of(src * N + i * tm, tm)
        h_dst = h_scr[pl.ds(ioff, tm), :]
        # Two accumulating MXU matmuls — no lane-axis concatenate on the epilogue path.
        out = jnp.dot(agg.astype(jnp.bfloat16), wl_ref[0],
                      preferred_element_type=jnp.float32)
        out = out + jnp.dot(h_dst, wr_ref[0], preferred_element_type=jnp.float32)
        out = jnp.maximum(out + b_ref[0], 0.0)                   # bias + ReLU once
        out_bf16 = out.astype(jnp.bfloat16)
        # Next layer's input rows: stay in VMEM, no HBM round trip.
        ooff = pl.multiple_of(dst * N + i * tm, tm)
        h_scr[pl.ds(ooff, tm), :] = out_bf16
        # Fused global_add_pool partial for this row tile: (G, tm) @ (tm, Hp), bf16 MXU.
        pooled_ref[...] = jnp.dot(pool_ref[...], out_bf16,
                                  preferred_element_type=jnp.float32)[None, None]


def fused_sage_stack(x_pad, adj_i8, deg_inv, pool_mat, wl, wr, b):
    """Runs all L SAGEConv+ReLU layers.  Returns pooled partials (L, nrows, G, Hp) f32."""
    N, Hp = x_pad.shape
    L = wl.shape[0]
    G = pool_mat.shape[0]
    tm = min(256, N)       # dst-row tile
    tk = min(256, N)       # K (src) tile — 256 matches the 2x256 MXU on v6e/v7x
    assert N % tm == 0 and N % tk == 0, "N must be divisible by the tile sizes"
    nrows, nk = N // tm, N // tk

    adj_resident = (nrows == 1 and nk == 1)   # block index constant -> one DMA total
    cost = pl.CostEstimate(
        flops=int(L * (2 * N * N * Hp + 4 * N * Hp * Hp + 2 * G * N * Hp)),
        transcendentals=0,
        bytes_accessed=int(N * N * (1 if adj_resident else L)        # int8 adjacency
                           + x_pad.size * 2 + wl.size * 2 + wr.size * 2
                           + b.size * 4 + deg_inv.size * 4 + pool_mat.size * 2
                           + L * nrows * G * Hp * 4),
    )

    pooled_part = pl.pallas_call(
        functools.partial(_fused_sage_kernel, N=N, tm=tm, tk=tk),
        out_shape=jax.ShapeDtypeStruct((L, nrows, G, Hp), jnp.float32),
        grid_spec=pltpu.PrefetchScalarGridSpec(
            num_scalar_prefetch=0,
            grid=(L, nrows, nk),                                     # (layer, rows, K)
            in_specs=[
                pl.BlockSpec((N, Hp), lambda l, i, k: (0, 0)),       # x: VMEM-resident
                pl.BlockSpec((tm, tk), lambda l, i, k: (i, k)),      # int8 edge counts
                pl.BlockSpec((tm, 1), lambda l, i, k: (i, 0)),       # 1/deg per dst row
                pl.BlockSpec((1, Hp, Hp), lambda l, i, k: (l, 0, 0)),  # W_l (layer l)
                pl.BlockSpec((1, Hp, Hp), lambda l, i, k: (l, 0, 0)),  # W_r (layer l)
                pl.BlockSpec((1, 1, Hp), lambda l, i, k: (l, 0, 0)),   # bias (layer l)
                pl.BlockSpec((G, tm), lambda l, i, k: (0, i)),       # pool_mat columns
            ],
            out_specs=pl.BlockSpec((1, 1, G, Hp), lambda l, i, k: (l, i, 0, 0)),
            scratch_shapes=[
                pltpu.VMEM((tm, Hp), jnp.float32),        # aggregation accumulator
                pltpu.VMEM((2 * N, Hp), jnp.bfloat16),    # ping-pong h across layers
            ],
        ),
        compiler_params=pltpu.CompilerParams(
            # All "arbitrary": the layer axis and the VMEM-carried h make row tiles
            # order-dependent (fusion > megacore here; see header comment).
            dimension_semantics=("arbitrary", "arbitrary", "arbitrary"),
            vmem_limit_bytes=32 << 20,
        ),
        cost_estimate=cost,
    )(x_pad, adj_i8, deg_inv, wl, wr, b, pool_mat)
    return pooled_part


# ---------------------------------------------------------------------------
# Full GraphSAGE forward (padded output; real columns are [:, :hidden])
# ---------------------------------------------------------------------------
@jax.jit
def graphsage_forward(params, x_pad_bf16, adj_i8, deg_inv, pool_mat):
    pooled_part = fused_sage_stack(x_pad_bf16, adj_i8, deg_inv, pool_mat,
                                   params["wl"], params["wr"], params["b"])
    L, nrows, G, Hp = pooled_part.shape
    pooled = jnp.sum(pooled_part, axis=1)                       # tiny cross-tile reduce
    pooled_cat = jnp.transpose(pooled, (1, 0, 2)).reshape(G, L * Hp)   # == pool(cat(xs,1))
    # Final Linear + ReLU on (G, L*Hp): a few kFLOPs — left to XLA (a dedicated
    # pallas_call launch costs more than the compute).  Dropout: inference identity.
    out = jnp.maximum(pooled_cat @ params["w1"] + params["b1"], 0.0)
    return out


# ---------------------------------------------------------------------------
# Deterministic parameter / input construction (128-lane padded weights)
# ---------------------------------------------------------------------------
def glorot(key, shape):
    fan_in, fan_out = shape
    lim = (6.0 / (fan_in + fan_out)) ** 0.5
    return jax.random.uniform(key, shape, jnp.float32, -lim, lim)


def make_params(key, num_features, hidden, num_layers):
    Fp = _round_up(max(num_features, hidden), LANE)   # shared padded feature width
    Hp = _round_up(hidden, LANE)
    assert Fp == Hp, "chained layers require padded F == padded H"
    wl_list, wr_list, b_list = [], [], []
    dims_in = [num_features] + [hidden] * (num_layers - 1)
    for fin in dims_in:
        key, k1, k2 = jax.random.split(key, 3)
        w_l = glorot(k1, (fin, hidden))               # neighbor-aggregation projection
        w_r = glorot(k2, (fin, hidden))               # root projection
        wl_list.append(jnp.zeros((Hp, Hp), jnp.float32).at[:fin, :hidden].set(w_l))
        wr_list.append(jnp.zeros((Hp, Hp), jnp.float32).at[:fin, :hidden].set(w_r))
        b_list.append(jnp.zeros((1, Hp), jnp.float32))
    key, k1 = jax.random.split(key)
    w1 = glorot(k1, (num_layers * hidden, hidden))
    w1_pad = jnp.zeros((num_layers * Hp, Hp), jnp.float32)
    for l in range(num_layers):
        w1_pad = w1_pad.at[l * Hp:l * Hp + hidden, :hidden].set(
            w1[l * hidden:(l + 1) * hidden, :])
    b1 = jnp.zeros((1, Hp), jnp.float32)
    params = {
        "wl": jnp.stack(wl_list).astype(jnp.bfloat16),   # (L, Hp, Hp)
        "wr": jnp.stack(wr_list).astype(jnp.bfloat16),   # (L, Hp, Hp)
        "b": jnp.stack(b_list),                          # (L, 1, Hp) f32
        "w1": w1_pad,                                    # (L*Hp, Hp) f32
        "b1": b1,                                        # (1, Hp)   f32
    }
    return params, Fp, Hp


def build_graph(key, num_nodes, num_graphs, num_edges):
    k1, k2 = jax.random.split(key)
    src = jax.random.randint(k1, (num_edges,), 0, num_nodes)
    dst = jax.random.randint(k2, (num_edges,), 0, num_nodes)
    # Exact integer edge counts (keeps PyG multi-edge mean semantics).  int8 halves the
    # dominant HBM stream and 0/1/count values are exactly representable.
    counts = jnp.zeros((num_nodes, num_nodes), jnp.float32).at[dst, src].add(1.0)
    deg = jnp.sum(counts, axis=1, keepdims=True)
    deg_inv = (1.0 / jnp.maximum(deg, 1.0)).astype(jnp.float32)    # (N, 1) f32, exact
    adj_i8 = counts.astype(jnp.int8)
    batch = jnp.repeat(jnp.arange(num_graphs), num_nodes // num_graphs)
    pool_mat = jax.nn.one_hot(batch, num_graphs, dtype=jnp.float32).T   # (G, N)
    return adj_i8, deg_inv, pool_mat.astype(jnp.bfloat16)


if __name__ == "__main__":
    num_nodes = 256
    num_features = 16
    hidden = 32
    num_layers = 3
    num_graphs = 4
    num_edges = 1024

    root = jax.random.PRNGKey(0)
    k_params, k_x, k_graph = jax.random.split(root, 3)

    params, Fp, Hp = make_params(k_params, num_features, hidden, num_layers)
    x = jax.random.normal(k_x, (num_nodes, num_features), jnp.float32)
    x_pad = jnp.zeros((num_nodes, Fp), jnp.float32).at[:, :num_features].set(x)
    x_pad = x_pad.astype(jnp.bfloat16)
    adj_i8, deg_inv, pool_mat = build_graph(k_graph, num_nodes, num_graphs, num_edges)

    out_pad = graphsage_forward(params, x_pad, adj_i8, deg_inv, pool_mat)
    out_pad = jax.block_until_ready(out_pad)
    out = out_pad[:, :hidden]                                   # strip lane padding

    assert out.shape == (num_graphs, hidden)
    assert bool(jnp.all(jnp.isfinite(out)))
    print("KERNEL_OK")
</pallas_src>

<mosaic_0001>
module attributes {stable_mosaic.version = 11 : i64} {
  func.func @_fused_sage_kernel(%arg0: i32, %arg1: i32, %arg2: i32, %arg3: memref<256x128xbf16, #tpu.memory_space<vmem>>, %arg4: memref<256x256xi8, #tpu.memory_space<vmem>>, %arg5: memref<256x1xf32, #tpu.memory_space<vmem>>, %arg6: memref<1x128x128xbf16, #tpu.memory_space<vmem>>, %arg7: memref<1x128x128xbf16, #tpu.memory_space<vmem>>, %arg8: memref<1x1x128xf32, #tpu.memory_space<vmem>>, %arg9: memref<4x256xbf16, #tpu.memory_space<vmem>>, %arg10: memref<1x1x4x128xf32, #tpu.memory_space<vmem>>, %arg11: memref<256x128xf32, #tpu.memory_space<vmem>>, %arg12: memref<512x128xbf16, #tpu.memory_space<vmem>>) attributes {dimension_semantics = [#tpu.dimension_semantics<arbitrary>, #tpu.dimension_semantics<arbitrary>, #tpu.dimension_semantics<arbitrary>], iteration_bounds = array<i64: 3, 1, 1>, scalar_prefetch = 0 : i64, scratch_operands = 2 : i64, tpu.core_type = #tpu.core_type<tc>, window_params = [{pipeline_mode = #tpu.pipeline_mode<synchronous>, transform_indices = @transform_0, window_bounds = array<i64: 256, 128>}, {transform_indices = @transform_1, window_bounds = array<i64: 256, 256>}, {transform_indices = @transform_2, window_bounds = array<i64: 256, 1>}, {transform_indices = @transform_3, window_bounds = array<i64: 1, 128, 128>}, {transform_indices = @transform_4, window_bounds = array<i64: 1, 128, 128>}, {transform_indices = @transform_5, window_bounds = array<i64: 1, 1, 128>}, {transform_indices = @transform_6, window_bounds = array<i64: 4, 256>}, {transform_indices = @transform_7, window_bounds = array<i64: 1, 1, 4, 128>}]} {
    %c0_i32 = arith.constant 0 : i32
    %0 = arith.cmpi eq, %arg0, %c0_i32 : i32
    %c0_i32_0 = arith.constant 0 : i32
    %1 = arith.cmpi eq, %arg1, %c0_i32_0 : i32
    %2 = arith.andi %0, %1 : i1
    %c0_i32_1 = arith.constant 0 : i32
    %3 = arith.cmpi eq, %arg2, %c0_i32_1 : i32
    %4 = arith.andi %2, %3 : i1
    %5 = arith.extui %4 : i1 to i32
    %c0_i32_2 = arith.constant 0 : i32
    %6 = arith.cmpi ne, %5, %c0_i32_2 : i32
    scf.if %6 {
      %c0_19 = arith.constant 0 : index
      %c0_20 = arith.constant 0 : index
      %36 = vector.load %arg3[%c0_19, %c0_20] : memref<256x128xbf16, #tpu.memory_space<vmem>>, vector<256x128xbf16>
      %c0_21 = arith.constant 0 : index
      %c0_22 = arith.constant 0 : index
      %37 = vector.load %arg12[%c0_21, %c0_22] : memref<512x128xbf16, #tpu.memory_space<vmem>>, vector<256x128xbf16>
      tpu.vector_store %arg12[%c0_21, %c0_22], %36 {strides = array<i32>} : memref<512x128xbf16, #tpu.memory_space<vmem>>, vector<256x128xbf16>,
    } else {
    }
    %c0_i32_3 = arith.constant 0 : i32
    %7 = arith.cmpi eq, %arg2, %c0_i32_3 : i32
    %8 = arith.extui %7 : i1 to i32
    %c0_i32_4 = arith.constant 0 : i32
    %9 = arith.cmpi ne, %8, %c0_i32_4 : i32
    scf.if %9 {
      %cst_19 = arith.constant 0.000000e+00 : f32
      %36 = vector.broadcast %cst_19 : f32 to vector<256x128xf32>
      %c0_20 = arith.constant 0 : index
      %c0_21 = arith.constant 0 : index
      %37 = vector.load %arg11[%c0_20, %c0_21] : memref<256x128xf32, #tpu.memory_space<vmem>>, vector<256x128xf32>
      tpu.vector_store %arg11[%c0_20, %c0_21], %36 {strides = array<i32>} : memref<256x128xf32, #tpu.memory_space<vmem>>, vector<256x128xf32>,
    } else {
    }
    %c2_i32 = arith.constant 2 : i32
    %c0_i32_5 = arith.constant 0 : i32
    %10 = arith.cmpi eq, %c2_i32, %c0_i32_5 : i32
    %c1_i32 = arith.constant 1 : i32
    %11 = arith.select %10, %c1_i32, %c2_i32 : i32
    %12 = arith.remsi %arg0, %11 : i32
    %c0_i32_6 = arith.constant 0 : i32
    %13 = arith.cmpi ne, %12, %c0_i32_6 : i32
    %c0_i32_7 = arith.constant 0 : i32
    %14 = arith.cmpi slt, %12, %c0_i32_7 : i32
    %c0_i32_8 = arith.constant 0 : i32
    %15 = arith.cmpi slt, %11, %c0_i32_8 : i32
    %16 = arith.xori %14, %15 : i1
    %17 = arith.andi %16, %13 : i1
    %18 = arith.addi %12, %11 : i32
    %19 = arith.select %17, %18, %12 : i32
    %c1_i32_9 = arith.constant 1 : i32
    %20 = arith.subi %c1_i32_9, %19 : i32
    %c256_i32 = arith.constant 256 : i32
    %21 = arith.muli %19, %c256_i32 : i32
    %c256_i32_10 = arith.constant 256 : i32
    %22 = arith.muli %arg2, %c256_i32_10 : i32
    %23 = arith.addi %21, %22 : i32
    %24 = tpu.assume_multiple %23, 256 : i32
    %25 = arith.index_cast %24 : i32 to index
    %c0 = arith.constant 0 : index
    %26 = vector.load %arg12[%25, %c0] : memref<512x128xbf16, #tpu.memory_space<vmem>>, vector<256x128xbf16>
    %c0_11 = arith.constant 0 : index
    %c0_12 = arith.constant 0 : index
    %27 = vector.load %arg11[%c0_11, %c0_12] : memref<256x128xf32, #tpu.memory_space<vmem>>, vector<256x128xf32>
    %c0_13 = arith.constant 0 : index
    %c0_14 = arith.constant 0 : index
    %28 = vector.load %arg4[%c0_13, %c0_14] : memref<256x256xi8, #tpu.memory_space<vmem>>, vector<256x256xi8>
    %29 = arith.sitofp %28 : vector<256x256xi8> to vector<256x256xbf16>
    %cst = arith.constant dense<0.000000e+00> : vector<256x128xf32>
    %30 = tpu.matmul %29, %26, %cst {dimension_numbers = #tpu.dot_dimension_numbers<[1], [0], [0], [1], [0, 0, 1, 1], [], []>} : vector<256x256xbf16>, vector<256x128xbf16>, vector<256x128xf32> -> vector<256x128xf32>
    %31 = arith.addf %27, %30 : vector<256x128xf32>
    %c0_15 = arith.constant 0 : index
    %c0_16 = arith.constant 0 : index
    %32 = vector.load %arg11[%c0_15, %c0_16] : memref<256x128xf32, #tpu.memory_space<vmem>>, vector<256x128xf32>
    tpu.vector_store %arg11[%c0_15, %c0_16], %31 {strides = array<i32>} : memref<256x128xf32, #tpu.memory_space<vmem>>, vector<256x128xf32>,
    %c0_i32_17 = arith.constant 0 : i32
    %33 = arith.cmpi eq, %arg2, %c0_i32_17 : i32
    %34 = arith.extui %33 : i1 to i32
    %c0_i32_18 = arith.constant 0 : i32
    %35 = arith.cmpi ne, %34, %c0_i32_18 : i32
    scf.if %35 {
      %c0_19 = arith.constant 0 : index
      %c0_20 = arith.constant 0 : index
      %36 = vector.load %arg11[%c0_19, %c0_20] : memref<256x128xf32, #tpu.memory_space<vmem>>, vector<256x128xf32>
      %c0_21 = arith.constant 0 : index
      %c0_22 = arith.constant 0 : index
      %37 = vector.load %arg5[%c0_21, %c0_22] : memref<256x1xf32, #tpu.memory_space<vmem>>, vector<256x1xf32>
      %38 = vector.broadcast %37 : vector<256x1xf32> to vector<256x128xf32>
      %39 = arith.mulf %36, %38 : vector<256x128xf32>
      %c256_i32_23 = arith.constant 256 : i32
      %40 = arith.muli %19, %c256_i32_23 : i32
      %c256_i32_24 = arith.constant 256 : i32
      %41 = arith.muli %arg1, %c256_i32_24 : i32
      %42 = arith.addi %40, %41 : i32
      %43 = tpu.assume_multiple %42, 256 : i32
      %44 = arith.index_cast %43 : i32 to index
      %c0_25 = arith.constant 0 : index
      %45 = vector.load %arg12[%44, %c0_25] : memref<512x128xbf16, #tpu.memory_space<vmem>>, vector<256x128xbf16>
      %46 = arith.truncf %39 : vector<256x128xf32> to vector<256x128xbf16>
      %c0_26 = arith.constant 0 : index
      %c0_27 = arith.constant 0 : index
      %c0_28 = arith.constant 0 : index
      %47 = vector.load %arg6[%c0_26, %c0_27, %c0_28] : memref<1x128x128xbf16, #tpu.memory_space<vmem>>, vector<1x128x128xbf16>
      %48 = vector.shape_cast %47 : vector<1x128x128xbf16> to vector<128x128xbf16>
      %cst_29 = arith.constant dense<0.000000e+00> : vector<256x128xf32>
      %49 = tpu.matmul %46, %48, %cst_29 {dimension_numbers = #tpu.dot_dimension_numbers<[1], [0], [0], [1], [0, 0, 1, 1], [], []>} : vector<256x128xbf16>, vector<128x128xbf16>, vector<256x128xf32> -> vector<256x128xf32>
      %c0_30 = arith.constant 0 : index
      %c0_31 = arith.constant 0 : index
      %c0_32 = arith.constant 0 : index
      %50 = vector.load %arg7[%c0_30, %c0_31, %c0_32] : memref<1x128x128xbf16, #tpu.memory_space<vmem>>, vector<1x128x128xbf16>
      %51 = vector.shape_cast %50 : vector<1x128x128xbf16> to vector<128x128xbf16>
      %cst_33 = arith.constant dense<0.000000e+00> : vector<256x128xf32>
      %52 = tpu.matmul %45, %51, %cst_33 {dimension_numbers = #tpu.dot_dimension_numbers<[1], [0], [0], [1], [0, 0, 1, 1], [], []>} : vector<256x128xbf16>, vector<128x128xbf16>, vector<256x128xf32> -> vector<256x128xf32>
      %53 = arith.addf %49, %52 : vector<256x128xf32>
      %c0_34 = arith.constant 0 : index
      %c0_35 = arith.constant 0 : index
      %c0_36 = arith.constant 0 : index
      %54 = vector.load %arg8[%c0_34, %c0_35, %c0_36] : memref<1x1x128xf32, #tpu.memory_space<vmem>>, vector<1x1x128xf32>
      %55 = vector.shape_cast %54 : vector<1x1x128xf32> to vector<1x128xf32>
      %56 = vector.broadcast %55 : vector<1x128xf32> to vector<256x128xf32>
      %57 = arith.addf %53, %56 : vector<256x128xf32>
      %cst_37 = arith.constant 0.000000e+00 : f32
      %58 = vector.broadcast %cst_37 : f32 to vector<256x128xf32>
      %59 = arith.maximumf %57, %58 : vector<256x128xf32>
      %60 = arith.truncf %59 : vector<256x128xf32> to vector<256x128xbf16>
      %c256_i32_38 = arith.constant 256 : i32
      %61 = arith.muli %20, %c256_i32_38 : i32
      %c256_i32_39 = arith.constant 256 : i32
      %62 = arith.muli %arg1, %c256_i32_39 : i32
      %63 = arith.addi %61, %62 : i32
      %64 = tpu.assume_multiple %63, 256 : i32
      %65 = arith.index_cast %64 : i32 to index
      %c0_40 = arith.constant 0 : index
      %66 = vector.load %arg12[%65, %c0_40] : memref<512x128xbf16, #tpu.memory_space<vmem>>, vector<256x128xbf16>
      tpu.vector_store %arg12[%65, %c0_40], %60 {strides = array<i32>} : memref<512x128xbf16, #tpu.memory_space<vmem>>, vector<256x128xbf16>,
      %c0_41 = arith.constant 0 : index
      %c0_42 = arith.constant 0 : index
      %67 = vector.load %arg9[%c0_41, %c0_42] : memref<4x256xbf16, #tpu.memory_space<vmem>>, vector<4x256xbf16>
      %cst_43 = arith.constant dense<0.000000e+00> : vector<4x128xf32>
      %68 = tpu.matmul %67, %60, %cst_43 {dimension_numbers = #tpu.dot_dimension_numbers<[1], [0], [0], [1], [0, 0, 1, 1], [], []>} : vector<4x256xbf16>, vector<256x128xbf16>, vector<4x128xf32> -> vector<4x128xf32>
      %69 = vector.shape_cast %68 : vector<4x128xf32> to vector<1x1x4x128xf32>
      %c0_44 = arith.constant 0 : index
      %c0_45 = arith.constant 0 : index
      %c0_46 = arith.constant 0 : index
      %c0_47 = arith.constant 0 : index
      %70 = vector.load %arg10[%c0_44, %c0_45, %c0_46, %c0_47] : memref<1x1x4x128xf32, #tpu.memory_space<vmem>>, vector<1x1x4x128xf32>
      tpu.vector_store %arg10[%c0_44, %c0_45, %c0_46, %c0_47], %69 {strides = array<i32>} : memref<1x1x4x128xf32, #tpu.memory_space<vmem>>, vector<1x1x4x128xf32>,
    } else {
    }
    return
  }
  func.func @transform_0(%arg0: i32, %arg1: i32, %arg2: i32) -> (i32, i32) {
    %c0_i32 = arith.constant 0 : i32
    %c0_i32_0 = arith.constant 0 : i32
    %c0_i32_1 = arith.constant 0 : i32
    return %c0_i32, %c0_i32_0 : i32, i32
  }
  func.func @transform_1(%arg0: i32, %arg1: i32, %arg2: i32) -> (i32, i32) {
    %c0_i32 = arith.constant 0 : i32
    return %arg1, %arg2 : i32, i32
  }
  func.func @transform_2(%arg0: i32, %arg1: i32, %arg2: i32) -> (i32, i32) {
    %c0_i32 = arith.constant 0 : i32
    %c0_i32_0 = arith.constant 0 : i32
    return %arg1, %c0_i32 : i32, i32
  }
  func.func @transform_3(%arg0: i32, %arg1: i32, %arg2: i32) -> (i32, i32, i32) {
    %c0_i32 = arith.constant 0 : i32
    %c0_i32_0 = arith.constant 0 : i32
    %c0_i32_1 = arith.constant 0 : i32
    return %arg0, %c0_i32, %c0_i32_0 : i32, i32, i32
  }
  func.func @transform_4(%arg0: i32, %arg1: i32, %arg2: i32) -> (i32, i32, i32) {
    %c0_i32 = arith.constant 0 : i32
    %c0_i32_0 = arith.constant 0 : i32
    %c0_i32_1 = arith.constant 0 : i32
    return %arg0, %c0_i32, %c0_i32_0 : i32, i32, i32
  }
  func.func @transform_5(%arg0: i32, %arg1: i32, %arg2: i32) -> (i32, i32, i32) {
    %c0_i32 = arith.constant 0 : i32
    %c0_i32_0 = arith.constant 0 : i32
    %c0_i32_1 = arith.constant 0 : i32
    return %arg0, %c0_i32, %c0_i32_0 : i32, i32, i32
  }
  func.func @transform_6(%arg0: i32, %arg1: i32, %arg2: i32) -> (i32, i32) {
    %c0_i32 = arith.constant 0 : i32
    %c0_i32_0 = arith.constant 0 : i32
    return %c0_i32, %arg1 : i32, i32
  }
  func.func @transform_7(%arg0: i32, %arg1: i32, %arg2: i32) -> (i32, i32, i32, i32) {
    %c0_i32 = arith.constant 0 : i32
    %c0_i32_0 = arith.constant 0 : i32
    %c0_i32_1 = arith.constant 0 : i32
    return %arg0, %arg1, %c0_i32, %c0_i32_0 : i32, i32, i32, i32
  }
}

</mosaic_0001>

<llo_original>
// kernel: graphsage_forward.1
$region0: #{graphsage_forward.1}
  #allocation0 [shape = 'u32[]', space=smem, size = 0x4, offset = 0x4, fixed_abs, tag = 'smem constant byte address 0x4 - core index']
  #allocation1 [shape = 'u32[144,128]{1,0:T(1,128)}', space=vmem, size = 0x12000, scoped, tag = 'internal scratch']
  #allocation2 [shape = 'f32[256,128]{1,0:T(8,128)}', space=vmem, size = 0x20000, scoped, tag = 'scratch operand']
  #allocation3 [shape = 'bf16[512,128]{1,0:T(8,128)(2,1)}', space=vmem, size = 0x20000, scoped, tag = 'scratch operand']
  %s0 = inlined_call_operand.hbm [shape: bf16[256,128], index: 0, kind: input, shape index: {}]
  %s1 = inlined_call_operand.hbm [shape: s8[256,256], index: 1, kind: input, shape index: {}]
  %s2 = inlined_call_operand.vmem [shape: f32[256,1], index: 2, kind: input, shape index: {}]
  %s3 = inlined_call_operand.vmem [shape: bf16[3,128,128], index: 3, kind: input, shape index: {}]
  %s4 = inlined_call_operand.hbm [shape: bf16[3,128,128], index: 4, kind: input, shape index: {}]
  %s5 = inlined_call_operand.vmem [shape: f32[3,1,128], index: 5, kind: input, shape index: {}]
  %s6 = inlined_call_operand.vmem [shape: bf16[4,256], index: 6, kind: input, shape index: {}]
  %s7 = inlined_call_operand.vmem [shape: f32[3,1,4,128], index: 7, kind: output, shape index: {}]
  %s8 = sld [smem:[#allocation0]]
  $region85: #{graphsage_forward.1} parent=0
    _
  %s10 = ssub.s32 1, %s8
  %s11 = scalar_select 0, %s10, %s8
  $region1: #{graphsage_forward.1} parent=0
    #allocation4 [shape = 'u8[65536]{0}', space=vmem, size = 0x10000, scoped, tag = 'input window, operand 0, single buffered']
    #allocation5 [shape = 's32[2]{0}', space=sflag, size = 0x8, scoped, tag = 'scoped memory for graphsage_forward.1']
    #allocation6 [shape = 'u8[65536]{0}', space=vmem, size = 0x10000, scoped, tag = 'input window, operand 1, single buffered']
    #allocation7 [shape = 's32[1]{0}', space=sflag, size = 0x4, scoped, tag = 'scoped memory for graphsage_forward.1']
    #allocation8 [shape = 'u8[65536]{0}', space=vmem, size = 0x10000, scoped, tag = 'input window, operand 4']
    %12 = vsyncpa [#allocation5], 0
    %13 = vsyncpa [#allocation7], 0
    loop: start=0, step=1, limit=5
    $region2: #{graphsage_forward.1} parent=1 // loop_pre_header
      _
    $region3: #{graphsage_forward.1} parent=1 // loop_header
      %s15 = sphi 0, %s19
      %p16 = scmp.ge.s32.totalorder %s15, 5
      %s22 = sphi 0, %s41
      %s23 = sphi 0, %s37
      %s24 = sphi 0, %s33
      %s25 = sphi 0, %s22
      %s26 = sphi 0, %s23
      %s27 = sphi 0, %s24
      %s28 = sphi 0, %s25
      %s29 = sphi 0, %s26
      %s30 = sphi 0, %s27
      %s42 = sphi 0, %s42
      %s44 = sphi 0, %s42
      %s45 = sphi 0, %s44
      %s59 = sphi 0, %s45
      %s67 = sphi 0, %s69
      %s70 = sphi 0, %s67
      %s71 = sphi 0, %s70
      %s87 = sphi 0, %s71
      %s93 = sphi 0, %s95
      %s96 = sphi 0, %s93
      %s97 = sphi 0, %s96
      %s113 = sphi 0, %s97
      %s119 = sphi 0, %s121
      %s122 = sphi 0, %s119
      %s123 = sphi 0, %s122
      %s139 = sphi 0, %s123
      %s145 = sphi 0, %s147
      %s148 = sphi 0, %s145
      %s149 = sphi 0, %s148
      %s165 = sphi 0, %s149
      %s171 = sphi 0, %s173
      %s174 = sphi 0, %s171
      %s175 = sphi 0, %s174
      %s191 = sphi 0, %s175
      %s197 = sphi 0, %s199
      %s200 = sphi 0, %s197
      %s201 = sphi 0, %s200
      %s217 = sphi 0, %s201
      %s225 = sphi 0, %s227
      %s228 = sphi 0, %s225
      %s229 = sphi 0, %s228
      %s245 = sphi 0, %s229
    $region4: #{graphsage_forward.1} parent=1 // loop_header_branch
      %18 = sbr.rel (%p16) target = $region8
    $region5: #{graphsage_forward.1} parent=1 // loop_body
      %s20 = ssub.s32 %s15, 1
      %s21 = ssub.s32 %s15, 2
      %s31 = sadd.s32 1, %s24
      %p32 = scmp.ge.s32.totalorder %s31, 1
      %s33 = scalar_select %p32, 0, %s31
      %s34 = sadd.s32 1, %s23
      %s35 = scalar_select %p32, %s34, %s23
      %p36 = scmp.ge.s32.totalorder %s35, 1
      %s37 = scalar_select %p36, 0, %s35
      %s38 = sadd.s32 1, %s22
      %s39 = scalar_select %p36, %s38, %s22
      %p40 = scmp.ge.s32.totalorder %s39, 3
      %s41 = scalar_select %p40, 0, %s39
      %s43 = sadd.s32 %s42, 1
      %p46 = scmp.eq.s32.totalorder %s15, 2
      %p47 = scmp.ne.s32.totalorder %s42, %s44
      %p48 = scmp.eq.s32.totalorder %s15, 0
      %p49 = por %p47, %p48
      %p50 = scmp.ne.s32.totalorder %s42, %s44
      %p51 = scmp.eq.s32.totalorder %s20, 2
      %p52 = por %p50, %p51
      %p53 = scmp.ne.s32.totalorder %s44, %s45
      %p54 = scmp.eq.s32.totalorder %s20, 0
      %p55 = por %p53, %p54
      %p56 = scmp.ne.s32.totalorder %s44, %s45
      %p57 = scmp.eq.s32.totalorder %s21, 2
      %p58 = por %p56, %p57
      %p60 = scmp.ne.s32.totalorder %s45, %s59
      %p61 = scmp.eq.s32.totalorder %s21, 0
      %p62 = por %p60, %p61
      %s63 = ssub.s32 %s23, %s37
      %s64 = ssub.s32 %s24, %s33
      %s65 = sor.u32 %s63, %s64
      %p66 = scmp.eq.s32.totalorder %s65, 0
      %s68 = sadd.s32 %s67, 1
      %s69 = scalar_select %p66, %s67, %s68
      %p72 = pneg %p66
      %p73 = scmp.eq.s32.totalorder %s15, 2
      %p74 = por %p72, %p73
      %p75 = scmp.ne.s32.totalorder %s67, %s70
      %p76 = scmp.eq.s32.totalorder %s15, 0
      %p77 = por %p75, %p76
      %p78 = scmp.ne.s32.totalorder %s67, %s70
      %p79 = scmp.eq.s32.totalorder %s20, 2
      %p80 = por %p78, %p79
      %p81 = scmp.ne.s32.totalorder %s70, %s71
      %p82 = scmp.eq.s32.totalorder %s20, 0
      %p83 = por %p81, %p82
      %p84 = scmp.ne.s32.totalorder %s70, %s71
      %p85 = scmp.eq.s32.totalorder %s21, 2
      %p86 = por %p84, %p85
      %p88 = scmp.ne.s32.totalorder %s71, %s87
      %p89 = scmp.eq.s32.totalorder %s21, 0
      %p90 = por %p88, %p89
      %s91 = ssub.s32 %s23, %s37
      %p92 = scmp.eq.s32.totalorder %s91, 0
      %s94 = sadd.s32 %s93, 1
      %s95 = scalar_select %p92, %s93, %s94
      %p98 = pneg %p92
      %p99 = scmp.eq.s32.totalorder %s15, 2
      %p100 = por %p98, %p99
      %p101 = scmp.ne.s32.totalorder %s93, %s96
      %p102 = scmp.eq.s32.totalorder %s15, 0
      %p103 = por %p101, %p102
      %p104 = scmp.ne.s32.totalorder %s93, %s96
      %p105 = scmp.eq.s32.totalorder %s20, 2
      %p106 = por %p104, %p105
      %p107 = scmp.ne.s32.totalorder %s96, %s97
      %p108 = scmp.eq.s32.totalorder %s20, 0
      %p109 = por %p107, %p108
      %p110 = scmp.ne.s32.totalorder %s96, %s97
      %p111 = scmp.eq.s32.totalorder %s21, 2
      %p112 = por %p110, %p111
      %p114 = scmp.ne.s32.totalorder %s97, %s113
      %p115 = scmp.eq.s32.totalorder %s21, 0
      %p116 = por %p114, %p115
      %s117 = ssub.s32 %s22, %s41
      %p118 = scmp.eq.s32.totalorder %s117, 0
      %s120 = sadd.s32 %s119, 1
      %s121 = scalar_select %p118, %s119, %s120
      %p124 = pneg %p118
      %p125 = scmp.eq.s32.totalorder %s15, 2
      %p126 = por %p124, %p125
      %p127 = scmp.ne.s32.totalorder %s119, %s122
      %p128 = scmp.eq.s32.totalorder %s15, 0
      %p129 = por %p127, %p128
      %p130 = scmp.ne.s32.totalorder %s119, %s122
      %p131 = scmp.eq.s32.totalorder %s20, 2
      %p132 = por %p130, %p131
      %p133 = scmp.ne.s32.totalorder %s122, %s123
      %p134 = scmp.eq.s32.totalorder %s20, 0
      %p135 = por %p133, %p134
      %p136 = scmp.ne.s32.totalorder %s122, %s123
      %p137 = scmp.eq.s32.totalorder %s21, 2
      %p138 = por %p136, %p137
      %p140 = scmp.ne.s32.totalorder %s123, %s139
      %p141 = scmp.eq.s32.totalorder %s21, 0
      %p142 = por %p140, %p141
      %s143 = ssub.s32 %s22, %s41
      %p144 = scmp.eq.s32.totalorder %s143, 0
      %s146 = sadd.s32 %s145, 1
      %s147 = scalar_select %p144, %s145, %s146
      %p150 = pneg %p144
      %p151 = scmp.eq.s32.totalorder %s15, 2
      %p152 = por %p150, %p151
      %p153 = scmp.ne.s32.totalorder %s145, %s148
      %p154 = scmp.eq.s32.totalorder %s15, 0
      %p155 = por %p153, %p154
      %p156 = scmp.ne.s32.totalorder %s145, %s148
      %p157 = scmp.eq.s32.totalorder %s20, 2
      %p158 = por %p156, %p157
      %p159 = scmp.ne.s32.totalorder %s148, %s149
      %p160 = scmp.eq.s32.totalorder %s20, 0
      %p161 = por %p159, %p160
      %p162 = scmp.ne.s32.totalorder %s148, %s149
      %p163 = scmp.eq.s32.totalorder %s21, 2
      %p164 = por %p162, %p163
      %p166 = scmp.ne.s32.totalorder %s149, %s165
      %p167 = scmp.eq.s32.totalorder %s21, 0
      %p168 = por %p166, %p167
      %s169 = ssub.s32 %s22, %s41
      %p170 = scmp.eq.s32.totalorder %s169, 0
      %s172 = sadd.s32 %s171, 1
      %s173 = scalar_select %p170, %s171, %s172
      %p176 = pneg %p170
      %p177 = scmp.eq.s32.totalorder %s15, 2
      %p178 = por %p176, %p177
      %p179 = scmp.ne.s32.totalorder %s171, %s174
      %p180 = scmp.eq.s32.totalorder %s15, 0
      %p181 = por %p179, %p180
      %p182 = scmp.ne.s32.totalorder %s171, %s174
      %p183 = scmp.eq.s32.totalorder %s20, 2
      %p184 = por %p182, %p183
      %p185 = scmp.ne.s32.totalorder %s174, %s175
      %p186 = scmp.eq.s32.totalorder %s20, 0
      %p187 = por %p185, %p186
      %p188 = scmp.ne.s32.totalorder %s174, %s175
      %p189 = scmp.eq.s32.totalorder %s21, 2
      %p190 = por %p188, %p189
      %p192 = scmp.ne.s32.totalorder %s175, %s191
      %p193 = scmp.eq.s32.totalorder %s21, 0
      %p194 = por %p192, %p193
      %s195 = ssub.s32 %s23, %s37
      %p196 = scmp.eq.s32.totalorder %s195, 0
      %s198 = sadd.s32 %s197, 1
      %s199 = scalar_select %p196, %s197, %s198
      %p202 = pneg %p196
      %p203 = scmp.eq.s32.totalorder %s15, 2
      %p204 = por %p202, %p203
      %p205 = scmp.ne.s32.totalorder %s197, %s200
      %p206 = scmp.eq.s32.totalorder %s15, 0
      %p207 = por %p205, %p206
      %p208 = scmp.ne.s32.totalorder %s197, %s200
      %p209 = scmp.eq.s32.totalorder %s20, 2
      %p210 = por %p208, %p209
      %p211 = scmp.ne.s32.totalorder %s200, %s201
      %p212 = scmp.eq.s32.totalorder %s20, 0
      %p213 = por %p211, %p212
      %p214 = scmp.ne.s32.totalorder %s200, %s201
      %p215 = scmp.eq.s32.totalorder %s21, 2
      %p216 = por %p214, %p215
      %p218 = scmp.ne.s32.totalorder %s201, %s217
      %p219 = scmp.eq.s32.totalorder %s21, 0
      %p220 = por %p218, %p219
      %s221 = ssub.s32 %s22, %s41
      %s222 = ssub.s32 %s23, %s37
      %s223 = sor.u32 %s221, %s222
      %p224 = scmp.eq.s32.totalorder %s223, 0
      %s226 = sadd.s32 %s225, 1
      %s227 = scalar_select %p224, %s225, %s226
      %p230 = pneg %p224
      %p231 = scmp.eq.s32.totalorder %s15, 2
      %p232 = por %p230, %p231
      %p233 = scmp.ne.s32.totalorder %s225, %s228
      %p234 = scmp.eq.s32.totalorder %s15, 0
      %p235 = por %p233, %p234
      %p236 = scmp.ne.s32.totalorder %s225, %s228
      %p237 = scmp.eq.s32.totalorder %s20, 2
      %p238 = por %p236, %p237
      %p239 = scmp.ne.s32.totalorder %s228, %s229
      %p240 = scmp.eq.s32.totalorder %s20, 0
      %p241 = por %p239, %p240
      %p242 = scmp.ne.s32.totalorder %s228, %s229
      %p243 = scmp.eq.s32.totalorder %s21, 2
      %p244 = por %p242, %p243
      %p246 = scmp.ne.s32.totalorder %s229, %s245
      %p247 = scmp.eq.s32.totalorder %s21, 0
      %p248 = por %p246, %p247
      %p249 = scmp.le.s32.totalorder 1, %s15
      %p250 = scmp.lt.s32.totalorder %s15, 4
      %p251 = pnand %p249, %p250
      %p252 = pneg %p251
      // Predicated region
      $region9: #{graphsage_forward.1} parent=5 // pred_check
        _
      $region10: #{graphsage_forward.1} parent=5 // pred_check_branch
        %254 = sbr.rel (%p251) target = $region12
      $region11: #{graphsage_forward.1} parent=5 // pred_region
        %s255 = ssub.s32 %s15, 1
        // Predicated region
        $region13: #{graphsage_forward.1} parent=11 // pred_check
          %p256 = pneg %p55
        $region14: #{graphsage_forward.1} parent=11 // pred_check_branch
          %258 = sbr.rel (%p256) target = $region16
        $region15: #{graphsage_forward.1} parent=11 // pred_region
          %s260 = ssub.s32 2048, 2048
          %261 = vsyncadd [#allocation5], %s260
          %s262 = sshll.u32 [#allocation4], 4
          %s263 = int_to_ptr.vmem [resolvable:$true] %s262
          %268 = dma.hbm_to_vmem [thread:$0]  %s0, 2048, %s263, [#allocation5], 64, 64, 4
        $region16: #{graphsage_forward.1} parent=11 // pred_fallthru
          _
        // Predicated region
        $region17: #{graphsage_forward.1} parent=11 // pred_check
          %p269 = pneg %p83
        $region18: #{graphsage_forward.1} parent=11 // pred_check_branch
          %271 = sbr.rel (%p269) target = $region20
        $region19: #{graphsage_forward.1} parent=11 // pred_region
          %s272 = smul.u32 8, %s26
          %s273 = smul.u32 2, %s27
          %s275 = ssub.s32 2048, 2048
          %276 = vsyncadd [#allocation7], %s275
          %s277 = smul.addr %s272, 2
          %s278 = sadd.s32 %s273, %s277
          %s279 = smul.addr %s278, 128
          %s280 = scalar_lea.hbm %s1, %s279
          %s281 = sshll.u32 [#allocation6], 4
          %s282 = int_to_ptr.vmem [resolvable:$true] %s281
          %287 = dma.hbm_to_vmem [thread:$0]  %s280, 2048, %s282, [#allocation7], 256, 256, 16
        $region20: #{graphsage_forward.1} parent=11 // pred_fallthru
          _
        // Predicated region
        $region21: #{graphsage_forward.1} parent=11 // pred_check
          %p288 = pneg %p109
        $region22: #{graphsage_forward.1} parent=11 // pred_check_branch
          %290 = sbr.rel (%p288) target = $region24
        $region23: #{graphsage_forward.1} parent=11 // pred_region
          %s291 = smul.u32 32, %s26
          %p292 = scmp.lt.s32.totalorder %s291, 31
          %s293 = scalar_select %p292, %s291, 31
          %s294 = smul.addr %s293, 8
          %s295 = scalar_lea.vmem %s2, %s294
          %s296 = smul.u32 32, %s26
        $region24: #{graphsage_forward.1} parent=11 // pred_fallthru
          _
        // Predicated region
        $region25: #{graphsage_forward.1} parent=11 // pred_check
          %p297 = pneg %p213
        $region26: #{graphsage_forward.1} parent=11 // pred_check_branch
          %299 = sbr.rel (%p297) target = $region28
        $region27: #{graphsage_forward.1} parent=11 // pred_region
          %s300 = smul.u32 2, %s26
          %p301 = scmp.lt.s32.totalorder %s300, 1
          %s302 = scalar_select %p301, %s300, 1
          %s303 = smul.addr %s302, 2
          %s304 = scalar_lea.vmem %s6, %s303
          %s305 = smul.u32 2, %s26
        $region28: #{graphsage_forward.1} parent=11 // pred_fallthru
          _
      $region12: #{graphsage_forward.1} parent=5 // pred_fallthru
        _
      %p306 = scmp.lt.s32.totalorder %s15, 3
      // Predicated region
      $region29: #{graphsage_forward.1} parent=5 // pred_check
        %p307 = pneg %p306
      $region30: #{graphsage_forward.1} parent=5 // pred_check_branch
        %309 = sbr.rel (%p307) target = $region32
      $region31: #{graphsage_forward.1} parent=5 // pred_region
        // Predicated region
        $region33: #{graphsage_forward.1} parent=31 // pred_check
          %p310 = pneg %p129
        $region34: #{graphsage_forward.1} parent=31 // pred_check_branch
          %312 = sbr.rel (%p310) target = $region36
        $region35: #{graphsage_forward.1} parent=31 // pred_region
          %p313 = scmp.lt.s32.totalorder %s22, 2
          %s314 = scalar_select %p313, %s22, 2
          %s315 = smul.addr %s314, 16
          %s316 = smul.addr %s315, 4
          %s317 = scalar_lea.vmem %s3, %s316
        $region36: #{graphsage_forward.1} parent=31 // pred_fallthru
          _
        // Predicated region
        $region37: #{graphsage_forward.1} parent=31 // pred_check
          %p318 = pneg %p155
        $region38: #{graphsage_forward.1} parent=31 // pred_check_branch
          %320 = sbr.rel (%p318) target = $region40
        $region39: #{graphsage_forward.1} parent=31 // pred_region
          %s321 = sand.u32 %s15, 1
          %s322 = scalar_lea.sflag [#allocation5], %s321
          %s323 = sand.u32 %s145, 1
          %s324 = smul.addr %s323, 64
          %s325 = scalar_lea.vmem [#allocation8], %s324
          %s327 = ssub.s32 1024, 1024
          %328 = vsyncadd %s322, %s327
          %s329 = smul.addr %s22, 16
          %s330 = smul.addr %s329, 64
          %s331 = scalar_lea.hbm %s4, %s330
          %s332 = sshll.u32 %s325, 4
          %s333 = int_to_ptr.vmem [resolvable:$true] %s332
          %338 = dma.hbm_to_vmem [thread:$0]  %s331, 1024, %s333, %s322, 64, 64, 4
        $region40: #{graphsage_forward.1} parent=31 // pred_fallthru
          _
        // Predicated region
        $region41: #{graphsage_forward.1} parent=31 // pred_check
          %p339 = pneg %p181
        $region42: #{graphsage_forward.1} parent=31 // pred_check_branch
          %341 = sbr.rel (%p339) target = $region44
        $region43: #{graphsage_forward.1} parent=31 // pred_region
          %p342 = scmp.lt.s32.totalorder %s22, 2
          %s343 = scalar_select %p342, %s22, 2
          %s344 = scalar_lea.vmem %s5, %s343
        $region44: #{graphsage_forward.1} parent=31 // pred_fallthru
          _
      $region32: #{graphsage_forward.1} parent=5 // pred_fallthru
        _
      %p345 = scmp.le.s32.totalorder 1, %s15
      %p346 = scmp.lt.s32.totalorder %s15, 4
      %p347 = pnand %p345, %p346
      %p348 = pneg %p347
      // Predicated region
      $region45: #{graphsage_forward.1} parent=5 // pred_check
        _
      $region46: #{graphsage_forward.1} parent=5 // pred_check_branch
        %350 = sbr.rel (%p347) target = $region48
      $region47: #{graphsage_forward.1} parent=5 // pred_region
        %s351 = ssub.s32 %s15, 1
        // Predicated region
        $region49: #{graphsage_forward.1} parent=47 // pred_check
          %p352 = pneg %p55
        $region50: #{graphsage_forward.1} parent=47 // pred_check_branch
          %354 = sbr.rel (%p352) target = $region52
        $region51: #{graphsage_forward.1} parent=47 // pred_region
          %355 = dma.done [#allocation5], 2048
        $region52: #{graphsage_forward.1} parent=47 // pred_fallthru
          _
        // Predicated region
        $region53: #{graphsage_forward.1} parent=47 // pred_check
          %p356 = pneg %p83
        $region54: #{graphsage_forward.1} parent=47 // pred_check_branch
          %358 = sbr.rel (%p356) target = $region56
        $region55: #{graphsage_forward.1} parent=47 // pred_region
          %359 = dma.done [#allocation7], 2048
        $region56: #{graphsage_forward.1} parent=47 // pred_fallthru
          _
        %s360 = sand.u32 %s20, 1
        %s361 = scalar_lea.sflag [#allocation5], %s360
        %s362 = sand.u32 %s148, 1
        %s363 = smul.addr %s362, 64
        %s364 = scalar_lea.vmem [#allocation8], %s363
        // Predicated region
        $region57: #{graphsage_forward.1} parent=47 // pred_check
          %p365 = pneg %p161
        $region58: #{graphsage_forward.1} parent=47 // pred_check_branch
          %367 = sbr.rel (%p365) target = $region60
        $region59: #{graphsage_forward.1} parent=47 // pred_region
          %368 = dma.done %s361, 1024
        $region60: #{graphsage_forward.1} parent=47 // pred_fallthru
          _
        %p369 = pneg %p55
        %p370 = pneg %p52
        %p371 = pneg %p83
        %p372 = pneg %p80
        %s373 = smul.u32 32, %s26
        %p374 = scmp.lt.s32.totalorder %s373, 31
        %s375 = scalar_select %p374, %s373, 31
        %s376 = smul.addr %s375, 8
        %s377 = scalar_lea.vmem %s2, %s376
        %p378 = pneg %p109
        %p379 = pneg %p106
        %p380 = scmp.lt.s32.totalorder %s25, 2
        %s381 = scalar_select %p380, %s25, 2
        %s382 = smul.addr %s381, 16
        %s383 = smul.addr %s382, 4
        %s384 = scalar_lea.vmem %s3, %s383
        %p385 = pneg %p135
        %p386 = pneg %p132
        %s387 = sand.u32 %s20, 1
        %s388 = scalar_lea.sflag [#allocation5], %s387
        %s389 = sand.u32 %s148, 1
        %s390 = smul.addr %s389, 64
        %s391 = scalar_lea.vmem [#allocation8], %s390
        %p392 = pneg %p161
        %p393 = pneg %p158
        %p394 = scmp.lt.s32.totalorder %s25, 2
        %s395 = scalar_select %p394, %s25, 2
        %s396 = scalar_lea.vmem %s5, %s395
        %p397 = pneg %p187
        %p398 = pneg %p184
        %s399 = smul.u32 2, %s26
        %p400 = scmp.lt.s32.totalorder %s399, 1
        %s401 = scalar_select %p400, %s399, 1
        %s402 = smul.addr %s401, 2
        %s403 = scalar_lea.vmem %s6, %s402
        %p404 = pneg %p213
        %p405 = pneg %p210
        %p406 = pneg %p241
        %p407 = pneg %p238
        %p408 = scmp.lt.s32.totalorder %s25, 2
        %s409 = scalar_select %p408, %s25, 2
        %p410 = scmp.lt.s32.totalorder %s26, 0
        %s411 = scalar_select %p410, %s26, 0
        %s412 = sadd.s32 %s411, %s409
        %s413 = smul.addr %s412, 4
        %s414 = scalar_lea.vmem %s7, %s413
        %s415 = smul.u32 8, %s26
        %s416 = smul.u32 2, %s27
        %s417 = smul.u32 32, %s26
        %p418 = scmp.lt.s32.totalorder %s417, 31
        %s419 = scalar_select %p418, %s417, 31
        %s420 = smul.addr %s419, 8
        %s421 = scalar_lea.vmem %s2, %s420
        %s422 = smul.u32 32, %s26
        %p423 = scmp.lt.s32.totalorder %s25, 2
        %s424 = scalar_select %p423, %s25, 2
        %s425 = smul.addr %s424, 16
        %s426 = smul.addr %s425, 4
        %s427 = scalar_lea.vmem %s3, %s426
        %p428 = scmp.lt.s32.totalorder %s25, 2
        %s429 = scalar_select %p428, %s25, 2
        %s430 = scalar_lea.vmem %s5, %s429
        %s431 = smul.u32 2, %s26
        %p432 = scmp.lt.s32.totalorder %s431, 1
        %s433 = scalar_select %p432, %s431, 1
        %s434 = smul.addr %s433, 2
        %s435 = scalar_lea.vmem %s6, %s434
        %s436 = smul.u32 2, %s26
        %p437 = scmp.lt.s32.totalorder %s25, 2
        %s438 = scalar_select %p437, %s25, 2
        %p439 = scmp.lt.s32.totalorder %s26, 0
        %s440 = scalar_select %p439, %s26, 0
        %s441 = sadd.s32 %s440, %s438
        %s442 = smul.addr %s441, 4
        %s443 = scalar_lea.vmem %s7, %s442
        %p445 = scmp.eq.s32.totalorder %s25, 0
        %p446 = scmp.eq.s32.totalorder %s26, 0
        %p447 = pnand %p445, %p446
        %p448 = pneg %p447
        %p449 = scmp.eq.s32.totalorder %s27, 0
        %p450 = pnand %p448, %p449
        %p451 = pneg %p450
        // Predicated region
        $region61: #{graphsage_forward.1} parent=47 // pred_check
          _
        $region62: #{graphsage_forward.1} parent=47 // pred_check_branch
          %453 = sbr.rel (%p450) target = $region64
        $region63: #{graphsage_forward.1} parent=47 // pred_region
          %v454 = vld [vmem:[#allocation4] sm:$0xf]
          %v455 = vld [vmem:[#allocation4 + $0x4] sm:$0xf]
          %v456 = vld [vmem:[#allocation4 + $0x8] sm:$0xf]
          %v457 = vld [vmem:[#allocation4 + $0xc] sm:$0xf]
          %v458 = vld [vmem:[#allocation4 + $0x10] sm:$0xf]
          %v459 = vld [vmem:[#allocation4 + $0x14] sm:$0xf]
          %v460 = vld [vmem:[#allocation4 + $0x18] sm:$0xf]
          %v461 = vld [vmem:[#allocation4 + $0x1c] sm:$0xf]
          %v462 = vld [vmem:[#allocation4 + $0x20] sm:$0xf]
          %v463 = vld [vmem:[#allocation4 + $0x24] sm:$0xf]
          %v464 = vld [vmem:[#allocation4 + $0x28] sm:$0xf]
          %v465 = vld [vmem:[#allocation4 + $0x2c] sm:$0xf]
          %v466 = vld [vmem:[#allocation4 + $0x30] sm:$0xf]
          %v467 = vld [vmem:[#allocation4 + $0x34] sm:$0xf]
          %v468 = vld [vmem:[#allocation4 + $0x38] sm:$0xf]
          %v469 = vld [vmem:[#allocation4 + $0x3c] sm:$0xf]
          %v470 = vld [vmem:[#allocation4 + $0x40] sm:$0xf]
          %v471 = vld [vmem:[#allocation4 + $0x44] sm:$0xf]
          %v472 = vld [vmem:[#allocation4 + $0x48] sm:$0xf]
          %v473 = vld [vmem:[#allocation4 + $0x4c] sm:$0xf]
          %v474 = vld [vmem:[#allocation4 + $0x50] sm:$0xf]
          %v475 = vld [vmem:[#allocation4 + $0x54] sm:$0xf]
          %v476 = vld [vmem:[#allocation4 + $0x58] sm:$0xf]
          %v477 = vld [vmem:[#allocation4 + $0x5c] sm:$0xf]
          %v478 = vld [vmem:[#allocation4 + $0x60] sm:$0xf]
          %v479 = vld [vmem:[#allocation4 + $0x64] sm:$0xf]
          %v480 = vld [vmem:[#allocation4 + $0x68] sm:$0xf]
          %v481 = vld [vmem:[#allocation4 + $0x6c] sm:$0xf]
          %v482 = vld [vmem:[#allocation4 + $0x70] sm:$0xf]
          %v483 = vld [vmem:[#allocation4 + $0x74] sm:$0xf]
          %v484 = vld [vmem:[#allocation4 + $0x78] sm:$0xf]
          %v485 = vld [vmem:[#allocation4 + $0x7c] sm:$0xf]
          %486 = vst [vmem:[#allocation3] sm:$0xf] %v454
          %487 = vst [vmem:[#allocation3 + $0x4] sm:$0xf] %v455
          %488 = vst [vmem:[#allocation3 + $0x8] sm:$0xf] %v456
          %489 = vst [vmem:[#allocation3 + $0xc] sm:$0xf] %v457
          %490 = vst [vmem:[#allocation3 + $0x10] sm:$0xf] %v458
          %491 = vst [vmem:[#allocation3 + $0x14] sm:$0xf] %v459
          %492 = vst [vmem:[#allocation3 + $0x18] sm:$0xf] %v460
          %493 = vst [vmem:[#allocation3 + $0x1c] sm:$0xf] %v461
          %494 = vst [vmem:[#allocation3 + $0x20] sm:$0xf] %v462
          %495 = vst [vmem:[#allocation3 + $0x24] sm:$0xf] %v463
          %496 = vst [vmem:[#allocation3 + $0x28] sm:$0xf] %v464
          %497 = vst [vmem:[#allocation3 + $0x2c] sm:$0xf] %v465
          %498 = vst [vmem:[#allocation3 + $0x30] sm:$0xf] %v466
          %499 = vst [vmem:[#allocation3 + $0x34] sm:$0xf] %v467
          %500 = vst [vmem:[#allocation3 + $0x38] sm:$0xf] %v468
          %501 = vst [vmem:[#allocation3 + $0x3c] sm:$0xf] %v469
          %502 = vst [vmem:[#allocation3 + $0x40] sm:$0xf] %v470
          %503 = vst [vmem:[#allocation3 + $0x44] sm:$0xf] %v471
          %504 = vst [vmem:[#allocation3 + $0x48] sm:$0xf] %v472
          %505 = vst [vmem:[#allocation3 + $0x4c] sm:$0xf] %v473
          %506 = vst [vmem:[#allocation3 + $0x50] sm:$0xf] %v474
          %507 = vst [vmem:[#allocation3 + $0x54] sm:$0xf] %v475
          %508 = vst [vmem:[#allocation3 + $0x58] sm:$0xf] %v476
          %509 = vst [vmem:[#allocation3 + $0x5c] sm:$0xf] %v477
          %510 = vst [vmem:[#allocation3 + $0x60] sm:$0xf] %v478
          %511 = vst [vmem:[#allocation3 + $0x64] sm:$0xf] %v479
          %512 = vst [vmem:[#allocation3 + $0x68] sm:$0xf] %v480
          %513 = vst [vmem:[#allocation3 + $0x6c] sm:$0xf] %v481
          %514 = vst [vmem:[#allocation3 + $0x70] sm:$0xf] %v482
          %515 = vst [vmem:[#allocation3 + $0x74] sm:$0xf] %v483
          %516 = vst [vmem:[#allocation3 + $0x78] sm:$0xf] %v484
          %517 = vst [vmem:[#allocation3 + $0x7c] sm:$0xf] %v485
        $region64: #{graphsage_forward.1} parent=47 // pred_fallthru
          _
        // Predicated region
        $region65: #{graphsage_forward.1} parent=47 // pred_check
          %p518 = pneg %p449
        $region66: #{graphsage_forward.1} parent=47 // pred_check_branch
          %520 = sbr.rel (%p518) target = $region68
        $region67: #{graphsage_forward.1} parent=47 // pred_region
          %521 = vst [vmem:[#allocation2] sm:$0xff] 0.0
          %522 = vst [vmem:[#allocation2 + $0x8] sm:$0xff] 0.0
          %523 = vst [vmem:[#allocation2 + $0x10] sm:$0xff] 0.0
          %524 = vst [vmem:[#allocation2 + $0x18] sm:$0xff] 0.0
          %525 = vst [vmem:[#allocation2 + $0x20] sm:$0xff] 0.0
          %526 = vst [vmem:[#allocation2 + $0x28] sm:$0xff] 0.0
          %527 = vst [vmem:[#allocation2 + $0x30] sm:$0xff] 0.0
          %528 = vst [vmem:[#allocation2 + $0x38] sm:$0xff] 0.0
          %529 = vst [vmem:[#allocation2 + $0x40] sm:$0xff] 0.0
          %530 = vst [vmem:[#allocation2 + $0x48] sm:$0xff] 0.0
          %531 = vst [vmem:[#allocation2 + $0x50] sm:$0xff] 0.0
          %532 = vst [vmem:[#allocation2 + $0x58] sm:$0xff] 0.0
          %533 = vst [vmem:[#allocation2 + $0x60] sm:$0xff] 0.0
          %534 = vst [vmem:[#allocation2 + $0x68] sm:$0xff] 0.0
          %535 = vst [vmem:[#allocation2 + $0x70] sm:$0xff] 0.0
          %536 = vst [vmem:[#allocation2 + $0x78] sm:$0xff] 0.0
          %537 = vst [vmem:[#allocation2 + $0x80] sm:$0xff] 0.0
          %538 = vst [vmem:[#allocation2 + $0x88] sm:$0xff] 0.0
          %539 = vst [vmem:[#allocation2 + $0x90] sm:$0xff] 0.0
          %540 = vst [vmem:[#allocation2 + $0x98] sm:$0xff] 0.0
          %541 = vst [vmem:[#allocation2 + $0xa0] sm:$0xff] 0.0
          %542 = vst [vmem:[#allocation2 + $0xa8] sm:$0xff] 0.0
          %543 = vst [vmem:[#allocation2 + $0xb0] sm:$0xff] 0.0
          %544 = vst [vmem:[#allocation2 + $0xb8] sm:$0xff] 0.0
          %545 = vst [vmem:[#allocation2 + $0xc0] sm:$0xff] 0.0
          %546 = vst [vmem:[#allocation2 + $0xc8] sm:$0xff] 0.0
          %547 = vst [vmem:[#allocation2 + $0xd0] sm:$0xff] 0.0
          %548 = vst [vmem:[#allocation2 + $0xd8] sm:$0xff] 0.0
          %549 = vst [vmem:[#allocation2 + $0xe0] sm:$0xff] 0.0
          %550 = vst [vmem:[#allocation2 + $0xe8] sm:$0xff] 0.0
          %551 = vst [vmem:[#allocation2 + $0xf0] sm:$0xff] 0.0
          %552 = vst [vmem:[#allocation2 + $0xf8] sm:$0xff] 0.0
        $region68: #{graphsage_forward.1} parent=47 // pred_fallthru
          _
        %p553 = scmp.lt.s32.totalorder %s25, 0
        %s554 = ssub.s32 0, %s25
        %s555 = scalar_select %p553, %s554, %s25
        %s556 = sand.u32 %s555, 1
        %s557 = ssub.s32 0, %s556
        %s558 = scalar_select %p553, %s557, %s556
        %p559 = scmp.ne.s32.totalorder %s558, 0
        %p560 = scmp.lt.s32.totalorder %s558, 0
        %p561 = pnand %p560, %p559
        %p562 = pneg %p561
        %s563 = sadd.s32 %s558, 2
        %s564 = scalar_select %p562, %s563, %s558
        %s565 = ssub.s32 1, %s564
        %s566 = smul.u32 %s564, 256
        %s567 = smul.u32 %s27, 256
        %s568 = sadd.s32 %s566, %s567
        %s569 = sshra.s32 %s568, 3
        %s570 = sand.u32 %s568, 7
        %s571 = smul.addr %s569, 4
        %s572 = scalar_lea.vmem [#allocation3], %s571
        %v573 = vld [vmem:[%s572] sm:$0xf]
        %v574 = vld [vmem:[%s572 + $0x4] sm:$0xf]
        %v575 = vld [vmem:[%s572 + $0x8] sm:$0xf]
        %v576 = vld [vmem:[%s572 + $0xc] sm:$0xf]
        %v577 = vld [vmem:[%s572 + $0x10] sm:$0xf]
        %v578 = vld [vmem:[%s572 + $0x14] sm:$0xf]
        %v579 = vld [vmem:[%s572 + $0x18] sm:$0xf]
        %v580 = vld [vmem:[%s572 + $0x1c] sm:$0xf]
        %v581 = vld [vmem:[%s572 + $0x20] sm:$0xf]
        %v582 = vld [vmem:[%s572 + $0x24] sm:$0xf]
        %v583 = vld [vmem:[%s572 + $0x28] sm:$0xf]
        %v584 = vld [vmem:[%s572 + $0x2c] sm:$0xf]
        %v585 = vld [vmem:[%s572 + $0x30] sm:$0xf]
        %v586 = vld [vmem:[%s572 + $0x34] sm:$0xf]
        %v587 = vld [vmem:[%s572 + $0x38] sm:$0xf]
        %v588 = vld [vmem:[%s572 + $0x3c] sm:$0xf]
        %v589 = vld [vmem:[%s572 + $0x40] sm:$0xf]
        %v590 = vld [vmem:[%s572 + $0x44] sm:$0xf]
        %v591 = vld [vmem:[%s572 + $0x48] sm:$0xf]
        %v592 = vld [vmem:[%s572 + $0x4c] sm:$0xf]
        %v593 = vld [vmem:[%s572 + $0x50] sm:$0xf]
        %v594 = vld [vmem:[%s572 + $0x54] sm:$0xf]
        %v595 = vld [vmem:[%s572 + $0x58] sm:$0xf]
        %v596 = vld [vmem:[%s572 + $0x5c] sm:$0xf]
        %v597 = vld [vmem:[%s572 + $0x60] sm:$0xf]
        %v598 = vld [vmem:[%s572 + $0x64] sm:$0xf]
        %v599 = vld [vmem:[%s572 + $0x68] sm:$0xf]
        %v600 = vld [vmem:[%s572 + $0x6c] sm:$0xf]
        %v601 = vld [vmem:[%s572 + $0x70] sm:$0xf]
        %v602 = vld [vmem:[%s572 + $0x74] sm:$0xf]
        %v603 = vld [vmem:[%s572 + $0x78] sm:$0xf]
        %v604 = vld [vmem:[%s572 + $0x7c] sm:$0xf]
        %v605 = vld [vmem:[#allocation2] sm:$0xff]
        %v606 = vld [vmem:[#allocation2 + $0x8] sm:$0xff]
        %v607 = vld [vmem:[#allocation2 + $0x10] sm:$0xff]
        %v608 = vld [vmem:[#allocation2 + $0x18] sm:$0xff]
        %v609 = vld [vmem:[#allocation2 + $0x20] sm:$0xff]
        %v610 = vld [vmem:[#allocation2 + $0x28] sm:$0xff]
        %v611 = vld [vmem:[#allocation2 + $0x30] sm:$0xff]
        %v612 = vld [vmem:[#allocation2 + $0x38] sm:$0xff]
        %v613 = vld [vmem:[#allocation2 + $0x40] sm:$0xff]
        %v614 = vld [vmem:[#allocation2 + $0x48] sm:$0xff]
        %v615 = vld [vmem:[#allocation2 + $0x50] sm:$0xff]
        %v616 = vld [vmem:[#allocation2 + $0x58] sm:$0xff]
        %v617 = vld [vmem:[#allocation2 + $0x60] sm:$0xff]
        %v618 = vld [vmem:[#allocation2 + $0x68] sm:$0xff]
        %v619 = vld [vmem:[#allocation2 + $0x70] sm:$0xff]
        %v620 = vld [vmem:[#allocation2 + $0x78] sm:$0xff]
        %v621 = vld [vmem:[#allocation2 + $0x80] sm:$0xff]
        %v622 = vld [vmem:[#allocation2 + $0x88] sm:$0xff]
        %v623 = vld [vmem:[#allocation2 + $0x90] sm:$0xff]
        %v624 = vld [vmem:[#allocation2 + $0x98] sm:$0xff]
        %v625 = vld [vmem:[#allocation2 + $0xa0] sm:$0xff]
        %v626 = vld [vmem:[#allocation2 + $0xa8] sm:$0xff]
        %v627 = vld [vmem:[#allocation2 + $0xb0] sm:$0xff]
        %v628 = vld [vmem:[#allocation2 + $0xb8] sm:$0xff]
        %v629 = vld [vmem:[#allocation2 + $0xc0] sm:$0xff]
        %v630 = vld [vmem:[#allocation2 + $0xc8] sm:$0xff]
        %v631 = vld [vmem:[#allocation2 + $0xd0] sm:$0xff]
        %v632 = vld [vmem:[#allocation2 + $0xd8] sm:$0xff]
        %v633 = vld [vmem:[#allocation2 + $0xe0] sm:$0xff]
        %v634 = vld [vmem:[#allocation2 + $0xe8] sm:$0xff]
        %v635 = vld [vmem:[#allocation2 + $0xf0] sm:$0xff]
        %v636 = vld [vmem:[#allocation2 + $0xf8] sm:$0xff]
        %v637 = vld [vmem:[#allocation6] sm:$0xff]
        %v638 = vld [vmem:[#allocation6 + $0x8] sm:$0xff]
        %v639 = vld [vmem:[#allocation6 + $0x10] sm:$0xff]
        %v640 = vld [vmem:[#allocation6 + $0x18] sm:$0xff]
        %v641 = vld [vmem:[#allocation6 + $0x20] sm:$0xff]
        %v642 = vld [vmem:[#allocation6 + $0x28] sm:$0xff]
        %v643 = vld [vmem:[#allocation6 + $0x30] sm:$0xff]
        %v644 = vld [vmem:[#allocation6 + $0x38] sm:$0xff]
        %v645 = vld [vmem:[#allocation6 + $0x40] sm:$0xff]
        %v646 = vld [vmem:[#allocation6 + $0x48] sm:$0xff]
        %v647 = vld [vmem:[#allocation6 + $0x50] sm:$0xff]
        %v648 = vld [vmem:[#allocation6 + $0x58] sm:$0xff]
        %v649 = vld [vmem:[#allocation6 + $0x60] sm:$0xff]
        %v650 = vld [vmem:[#allocation6 + $0x68] sm:$0xff]
        %v651 = vld [vmem:[#allocation6 + $0x70] sm:$0xff]
        %v652 = vld [vmem:[#allocation6 + $0x78] sm:$0xff]
        %v653 = vunpack.c.l.s8.bf16 %v637
        %v654 = vunpack.c.l.s8.bf16 %v638
        %v655 = vunpack.c.h.s8.bf16 %v637
        %v656 = vunpack.c.h.s8.bf16 %v638
        %v657 = vunpack.c.l.s8.bf16 %v639
        %v658 = vunpack.c.l.s8.bf16 %v640
        %v659 = vunpack.c.h.s8.bf16 %v639
        %v660 = vunpack.c.h.s8.bf16 %v640
        %v661 = vunpack.c.l.s8.bf16 %v641
        %v662 = vunpack.c.l.s8.bf16 %v642
        %v663 = vunpack.c.h.s8.bf16 %v641
        %v664 = vunpack.c.h.s8.bf16 %v642
        %v665 = vunpack.c.l.s8.bf16 %v643
        %v666 = vunpack.c.l.s8.bf16 %v644
        %v667 = vunpack.c.h.s8.bf16 %v643
        %v668 = vunpack.c.h.s8.bf16 %v644
        %v669 = vunpack.c.l.s8.bf16 %v645
        %v670 = vunpack.c.l.s8.bf16 %v646
        %v671 = vunpack.c.h.s8.bf16 %v645
        %v672 = vunpack.c.h.s8.bf16 %v646
        %v673 = vunpack.c.l.s8.bf16 %v647
        %v674 = vunpack.c.l.s8.bf16 %v648
        %v675 = vunpack.c.h.s8.bf16 %v647
        %v676 = vunpack.c.h.s8.bf16 %v648
        %v677 = vunpack.c.l.s8.bf16 %v649
        %v678 = vunpack.c.l.s8.bf16 %v650
        %v679 = vunpack.c.h.s8.bf16 %v649
        %v680 = vunpack.c.h.s8.bf16 %v650
        %v681 = vunpack.c.l.s8.bf16 %v651
        %v682 = vunpack.c.l.s8.bf16 %v652
        %v683 = vunpack.c.h.s8.bf16 %v651
        %v684 = vunpack.c.h.s8.bf16 %v652
        %v717 = vunpack.c.l.b16 %v573
        %v718 = vunpack.c.l.b16 %v574
        %v719 = vunpack.c.l.b16 %v575
        %v720 = vunpack.c.l.b16 %v576
        %v721 = vunpack.c.l.b16 %v577
        %v722 = vunpack.c.l.b16 %v578
        %v723 = vunpack.c.l.b16 %v579
        %v724 = vunpack.c.l.b16 %v580
        %v725 = vunpack.c.l.b16 %v581
        %v726 = vunpack.c.l.b16 %v582
        %v727 = vunpack.c.l.b16 %v583
        %v728 = vunpack.c.l.b16 %v584
        %v729 = vunpack.c.l.b16 %v585
        %v730 = vunpack.c.l.b16 %v586
        %v731 = vunpack.c.l.b16 %v587
        %v732 = vunpack.c.l.b16 %v588
        %v733 = vunpack.c.l.b16 %v589
        %v734 = vunpack.c.l.b16 %v590
        %v735 = vunpack.c.l.b16 %v591
        %v736 = vunpack.c.l.b16 %v592
        %v737 = vunpack.c.l.b16 %v593
        %v738 = vunpack.c.l.b16 %v594
        %v739 = vunpack.c.l.b16 %v595
        %v740 = vunpack.c.l.b16 %v596
        %v741 = vunpack.c.l.b16 %v597
        %v742 = vunpack.c.l.b16 %v598
        %v743 = vunpack.c.l.b16 %v599
        %v744 = vunpack.c.l.b16 %v600
        %v745 = vunpack.c.l.b16 %v601
        %v746 = vunpack.c.l.b16 %v602
        %v747 = vunpack.c.l.b16 %v603
        %v748 = vunpack.c.l.b16 %v604
        %v749 = vpack.c.b16 %v718, %v717
        %v750 = vpack.c.b16 %v720, %v719
        %v751 = vpack.c.b16 %v722, %v721
        %v752 = vpack.c.b16 %v724, %v723
        %v753 = vpack.c.b16 %v726, %v725
        %v754 = vpack.c.b16 %v728, %v727
        %v755 = vpack.c.b16 %v730, %v729
        %v756 = vpack.c.b16 %v732, %v731
        %v757 = vpack.c.b16 %v734, %v733
        %v758 = vpack.c.b16 %v736, %v735
        %v759 = vpack.c.b16 %v738, %v737
        %v760 = vpack.c.b16 %v740, %v739
        %v761 = vpack.c.b16 %v742, %v741
        %v762 = vpack.c.b16 %v744, %v743
        %v763 = vpack.c.b16 %v746, %v745
        %v764 = vpack.c.b16 %v748, %v747
        %781 = vmatprep.subr.bf16.mxu0 0
        %782 = vmatpush1.bf16.msra.mxu0 %v756
        %783 = vmatprep.subr.bf16.mxu0 0
        %784 = vmatpush1.bf16.msra.mxu0 %v755
        %785 = vmatprep.subr.bf16.mxu0 0
        %786 = vmatpush1.bf16.msra.mxu0 %v754
        %787 = vmatprep.subr.bf16.mxu0 0
        %788 = vmatpush1.bf16.msra.mxu0 %v753
        %789 = vmatprep.subr.bf16.mxu0 0
        %790 = vmatpush1.bf16.msra.mxu0 %v752
        %791 = vmatprep.subr.bf16.mxu0 0
        %792 = vmatpush1.bf16.msra.mxu0 %v751
        %793 = vmatprep.subr.bf16.mxu0 0
        %794 = vmatpush1.bf16.msra.mxu0 %v750
        %795 = vmatprep.subr.bf16.mxu0 0
        %796 = vmatpush1.bf16.msra.mxu0 %v749
        %797 = vmatprep.subr.bf16.mxu0 0
        %798 = vmatpush2.bf16.msra.mxu0 %v764
        %799 = vmatprep.subr.bf16.mxu0 0
        %800 = vmatpush2.bf16.msra.mxu0 %v763
        %801 = vmatprep.subr.bf16.mxu0 0
        %802 = vmatpush2.bf16.msra.mxu0 %v762
        %803 = vmatprep.subr.bf16.mxu0 0
        %804 = vmatpush2.bf16.msra.mxu0 %v761
        %805 = vmatprep.subr.bf16.mxu0 0
        %806 = vmatpush2.bf16.msra.mxu0 %v760
        %807 = vmatprep.subr.bf16.mxu0 0
        %808 = vmatpush2.bf16.msra.mxu0 %v759
        %809 = vmatprep.subr.bf16.mxu0 0
        %810 = vmatpush2.bf16.msra.mxu0 %v758
        %811 = vmatprep.subr.bf16.mxu0 0
        %812 = vmatpush2.bf16.msra.mxu0 %v757
        %813 = vmatprep.mubr.bf16.mxu0 %v654
        %814 = vmatmul.mubr.bf16.gmra.mxu0 %v653
        %v815 = vpop.f32.mrf.mxu0
        %v816 = vadd.f32 0.0, %v815
        %v817 = vpop.f32.mrf.mxu0
        %v818 = vpop.f32.mrf.mxu0
        %v819 = vadd.f32 0.0, %v818
        %v820 = vpop.f32.mrf.mxu0
        %821 = vmatprep.mubr.bf16.mxu0 %v656
        %822 = vmatmul.mubr.bf16.gmra.mxu0 %v655
        %v823 = vpop.f32.mrf.mxu0
        %v824 = vadd.f32 0.0, %v823
        %v825 = vpop.f32.mrf.mxu0
        %v826 = vpop.f32.mrf.mxu0
        %v827 = vadd.f32 0.0, %v826
        %v828 = vpop.f32.mrf.mxu0
        %829 = vmatprep.mubr.bf16.mxu0 %v658
        %830 = vmatmul.mubr.bf16.gmra.mxu0 %v657
        %v831 = vpop.f32.mrf.mxu0
        %v832 = vadd.f32 0.0, %v831
        %v833 = vpop.f32.mrf.mxu0
        %v834 = vpop.f32.mrf.mxu0
        %v835 = vadd.f32 0.0, %v834
        %v836 = vpop.f32.mrf.mxu0
        %837 = vmatprep.mubr.bf16.mxu0 %v660
        %838 = vmatmul.mubr.bf16.gmra.mxu0 %v659
        %v839 = vpop.f32.mrf.mxu0
        %v840 = vadd.f32 0.0, %v839
        %v841 = vpop.f32.mrf.mxu0
        %v842 = vpop.f32.mrf.mxu0
        %v843 = vadd.f32 0.0, %v842
        %v844 = vpop.f32.mrf.mxu0
        %845 = vmatprep.mubr.bf16.mxu0 %v662
        %846 = vmatmul.mubr.bf16.gmra.mxu0 %v661
        %v847 = vpop.f32.mrf.mxu0
        %v848 = vadd.f32 0.0, %v847
        %v849 = vpop.f32.mrf.mxu0
        %v850 = vpop.f32.mrf.mxu0
        %v851 = vadd.f32 0.0, %v850
        %v852 = vpop.f32.mrf.mxu0
        %853 = vmatprep.mubr.bf16.mxu0 %v664
        %854 = vmatmul.mubr.bf16.gmra.mxu0 %v663
        %v855 = vpop.f32.mrf.mxu0
        %v856 = vadd.f32 0.0, %v855
        %v857 = vpop.f32.mrf.mxu0
        %v858 = vpop.f32.mrf.mxu0
        %v859 = vadd.f32 0.0, %v858
        %v860 = vpop.f32.mrf.mxu0
        %861 = vmatprep.mubr.bf16.mxu0 %v666
        %862 = vmatmul.mubr.bf16.gmra.mxu0 %v665
        %v863 = vpop.f32.mrf.mxu0
        %v864 = vadd.f32 0.0, %v863
        %v865 = vpop.f32.mrf.mxu0
        %v866 = vpop.f32.mrf.mxu0
        %v867 = vadd.f32 0.0, %v866
        %v868 = vpop.f32.mrf.mxu0
        %869 = vmatprep.mubr.bf16.mxu0 %v668
        %870 = vmatmul.mubr.bf16.gmra.mxu0 %v667
        %v871 = vpop.f32.mrf.mxu0
        %v872 = vadd.f32 0.0, %v871
        %v873 = vpop.f32.mrf.mxu0
        %v874 = vpop.f32.mrf.mxu0
        %v875 = vadd.f32 0.0, %v874
        %v876 = vpop.f32.mrf.mxu0
        %877 = vmatprep.mubr.bf16.mxu0 %v670
        %878 = vmatmul.mubr.bf16.gmra.mxu0 %v669
        %v879 = vpop.f32.mrf.mxu0
        %v880 = vadd.f32 0.0, %v879
        %v881 = vpop.f32.mrf.mxu0
        %v882 = vpop.f32.mrf.mxu0
        %v883 = vadd.f32 0.0, %v882
        %v884 = vpop.f32.mrf.mxu0
        %885 = vmatprep.mubr.bf16.mxu0 %v672
        %886 = vmatmul.mubr.bf16.gmra.mxu0 %v671
        %v887 = vpop.f32.mrf.mxu0
        %v888 = vadd.f32 0.0, %v887
        %v889 = vpop.f32.mrf.mxu0
        %v890 = vpop.f32.mrf.mxu0
        %v891 = vadd.f32 0.0, %v890
        %v892 = vpop.f32.mrf.mxu0
        %893 = vmatprep.mubr.bf16.mxu0 %v674
        %894 = vmatmul.mubr.bf16.gmra.mxu0 %v673
        %v895 = vpop.f32.mrf.mxu0
        %v896 = vadd.f32 0.0, %v895
        %v897 = vpop.f32.mrf.mxu0
        %v898 = vpop.f32.mrf.mxu0
        %v899 = vadd.f32 0.0, %v898
        %v900 = vpop.f32.mrf.mxu0
        %901 = vmatprep.mubr.bf16.mxu0 %v676
        %902 = vmatmul.mubr.bf16.gmra.mxu0 %v675
        %v903 = vpop.f32.mrf.mxu0
        %v904 = vadd.f32 0.0, %v903
        %v905 = vpop.f32.mrf.mxu0
        %v906 = vpop.f32.mrf.mxu0
        %v907 = vadd.f32 0.0, %v906
        %v908 = vpop.f32.mrf.mxu0
        %909 = vmatprep.mubr.bf16.mxu0 %v678
        %910 = vmatmul.mubr.bf16.gmra.mxu0 %v677
        %v911 = vpop.f32.mrf.mxu0
        %v912 = vadd.f32 0.0, %v911
        %v913 = vpop.f32.mrf.mxu0
        %v914 = vpop.f32.mrf.mxu0
        %v915 = vadd.f32 0.0, %v914
        %v916 = vpop.f32.mrf.mxu0
        %917 = vmatprep.mubr.bf16.mxu0 %v680
        %918 = vmatmul.mubr.bf16.gmra.mxu0 %v679
        %v919 = vpop.f32.mrf.mxu0
        %v920 = vadd.f32 0.0, %v919
        %v921 = vpop.f32.mrf.mxu0
        %v922 = vpop.f32.mrf.mxu0
        %v923 = vadd.f32 0.0, %v922
        %v924 = vpop.f32.mrf.mxu0
        %925 = vmatprep.mubr.bf16.mxu0 %v682
        %926 = vmatmul.mubr.bf16.gmra.mxu0 %v681
        %v927 = vpop.f32.mrf.mxu0
        %v928 = vadd.f32 0.0, %v927
        %v929 = vpop.f32.mrf.mxu0
        %v930 = vpop.f32.mrf.mxu0
        %v931 = vadd.f32 0.0, %v930
        %v932 = vpop.f32.mrf.mxu0
        %933 = vmatprep.mubr.bf16.mxu0 %v684
        %934 = vmatmul.mubr.bf16.gmra.mxu0 %v683
        %v935 = vpop.f32.mrf.mxu0
        %v936 = vadd.f32 0.0, %v935
        %v937 = vpop.f32.mrf.mxu0
        %v938 = vpop.f32.mrf.mxu0
        %v939 = vadd.f32 0.0, %v938
        %v940 = vpop.f32.mrf.mxu0
        %941 = vdwg.mxu0
        %v942 = vadd.f32 %v605, %v816
        %v943 = vadd.f32 %v606, %v819
        %v944 = vadd.f32 %v607, %v824
        %v945 = vadd.f32 %v608, %v827
        %v946 = vadd.f32 %v609, %v832
        %v947 = vadd.f32 %v610, %v835
        %v948 = vadd.f32 %v611, %v840
        %v949 = vadd.f32 %v612, %v843
        %v950 = vadd.f32 %v613, %v848
        %v951 = vadd.f32 %v614, %v851
        %v952 = vadd.f32 %v615, %v856
        %v953 = vadd.f32 %v616, %v859
        %v954 = vadd.f32 %v617, %v864
        %v955 = vadd.f32 %v618, %v867
        %v956 = vadd.f32 %v619, %v872
        %v957 = vadd.f32 %v620, %v875
        %v958 = vadd.f32 %v621, %v880
        %v959 = vadd.f32 %v622, %v883
        %v960 = vadd.f32 %v623, %v888
        %v961 = vadd.f32 %v624, %v891
        %v962 = vadd.f32 %v625, %v896
        %v963 = vadd.f32 %v626, %v899
        %v964 = vadd.f32 %v627, %v904
        %v965 = vadd.f32 %v628, %v907
        %v966 = vadd.f32 %v629, %v912
        %v967 = vadd.f32 %v630, %v915
        %v968 = vadd.f32 %v631, %v920
        %v969 = vadd.f32 %v632, %v923
        %v970 = vadd.f32 %v633, %v928
        %v971 = vadd.f32 %v634, %v931
        %v972 = vadd.f32 %v635, %v936
        %v973 = vadd.f32 %v636, %v939
        %974 = vst [vmem:[#allocation2] sm:$0xff] %v942
        %975 = vst [vmem:[#allocation2 + $0x8] sm:$0xff] %v943
        %976 = vst [vmem:[#allocation2 + $0x10] sm:$0xff] %v944
        %977 = vst [vmem:[#allocation2 + $0x18] sm:$0xff] %v945
        %978 = vst [vmem:[#allocation2 + $0x20] sm:$0xff] %v946
        %979 = vst [vmem:[#allocation2 + $0x28] sm:$0xff] %v947
        %980 = vst [vmem:[#allocation2 + $0x30] sm:$0xff] %v948
        %981 = vst [vmem:[#allocation2 + $0x38] sm:$0xff] %v949
        %982 = vst [vmem:[#allocation2 + $0x40] sm:$0xff] %v950
        %983 = vst [vmem:[#allocation2 + $0x48] sm:$0xff] %v951
        %984 = vst [vmem:[#allocation2 + $0x50] sm:$0xff] %v952
        %985 = vst [vmem:[#allocation2 + $0x58] sm:$0xff] %v953
        %986 = vst [vmem:[#allocation2 + $0x60] sm:$0xff] %v954
        %987 = vst [vmem:[#allocation2 + $0x68] sm:$0xff] %v955
        %988 = vst [vmem:[#allocation2 + $0x70] sm:$0xff] %v956
        %989 = vst [vmem:[#allocation2 + $0x78] sm:$0xff] %v957
        %990 = vst [vmem:[#allocation2 + $0x80] sm:$0xff] %v958
        %991 = vst [vmem:[#allocation2 + $0x88] sm:$0xff] %v959
        %992 = vst [vmem:[#allocation2 + $0x90] sm:$0xff] %v960
        %993 = vst [vmem:[#allocation2 + $0x98] sm:$0xff] %v961
        %994 = vst [vmem:[#allocation2 + $0xa0] sm:$0xff] %v962
        %995 = vst [vmem:[#allocation2 + $0xa8] sm:$0xff] %v963
        %996 = vst [vmem:[#allocation2 + $0xb0] sm:$0xff] %v964
        %997 = vst [vmem:[#allocation2 + $0xb8] sm:$0xff] %v965
        %998 = vst [vmem:[#allocation2 + $0xc0] sm:$0xff] %v966
        %999 = vst [vmem:[#allocation2 + $0xc8] sm:$0xff] %v967
        %1000 = vst [vmem:[#allocation2 + $0xd0] sm:$0xff] %v968
        %1001 = vst [vmem:[#allocation2 + $0xd8] sm:$0xff] %v969
        %1002 = vst [vmem:[#allocation2 + $0xe0] sm:$0xff] %v970
        %1003 = vst [vmem:[#allocation2 + $0xe8] sm:$0xff] %v971
        %1004 = vst [vmem:[#allocation2 + $0xf0] sm:$0xff] %v972
        %1005 = vst [vmem:[#allocation2 + $0xf8] sm:$0xff] %v973
        // Predicated region
        $region69: #{graphsage_forward.1} parent=47 // pred_check
          %p1006 = pneg %p449
        $region70: #{graphsage_forward.1} parent=47 // pred_check_branch
          %1008 = sbr.rel (%p1006) target = $region72
        $region71: #{graphsage_forward.1} parent=47 // pred_region
          %v1009 = vld [vmem:[#allocation2] sm:$0xff]
          %v1010 = vld [vmem:[#allocation2 + $0x8] sm:$0xff]
          %v1011 = vld [vmem:[#allocation2 + $0x10] sm:$0xff]
          %v1012 = vld [vmem:[#allocation2 + $0x18] sm:$0xff]
          %v1013 = vld [vmem:[#allocation2 + $0x20] sm:$0xff]
          %v1014 = vld [vmem:[#allocation2 + $0x28] sm:$0xff]
          %v1015 = vld [vmem:[#allocation2 + $0x30] sm:$0xff]
          %v1016 = vld [vmem:[#allocation2 + $0x38] sm:$0xff]
          %v1017 = vld [vmem:[#allocation2 + $0x40] sm:$0xff]
          %v1018 = vld [vmem:[#allocation2 + $0x48] sm:$0xff]
          %v1019 = vld [vmem:[#allocation2 + $0x50] sm:$0xff]
          %v1020 = vld [vmem:[#allocation2 + $0x58] sm:$0xff]
          %v1021 = vld [vmem:[#allocation2 + $0x60] sm:$0xff]
          %v1022 = vld [vmem:[#allocation2 + $0x68] sm:$0xff]
          %v1023 = vld [vmem:[#allocation2 + $0x70] sm:$0xff]
          %v1024 = vld [vmem:[#allocation2 + $0x78] sm:$0xff]
          %v1025 = vld [vmem:[#allocation2 + $0x80] sm:$0xff]
          %v1026 = vld [vmem:[#allocation2 + $0x88] sm:$0xff]
          %v1027 = vld [vmem:[#allocation2 + $0x90] sm:$0xff]
          %v1028 = vld [vmem:[#allocation2 + $0x98] sm:$0xff]
          %v1029 = vld [vmem:[#allocation2 + $0xa0] sm:$0xff]
          %v1030 = vld [vmem:[#allocation2 + $0xa8] sm:$0xff]
          %v1031 = vld [vmem:[#allocation2 + $0xb0] sm:$0xff]
          %v1032 = vld [vmem:[#allocation2 + $0xb8] sm:$0xff]
          %v1033 = vld [vmem:[#allocation2 + $0xc0] sm:$0xff]
          %v1034 = vld [vmem:[#allocation2 + $0xc8] sm:$0xff]
          %v1035 = vld [vmem:[#allocation2 + $0xd0] sm:$0xff]
          %v1036 = vld [vmem:[#allocation2 + $0xd8] sm:$0xff]
          %v1037 = vld [vmem:[#allocation2 + $0xe0] sm:$0xff]
          %v1038 = vld [vmem:[#allocation2 + $0xe8] sm:$0xff]
          %v1039 = vld [vmem:[#allocation2 + $0xf0] sm:$0xff]
          %v1040 = vld [vmem:[#allocation2 + $0xf8] sm:$0xff]
          %v1041 = vld [vmem:[%s421] sm:$0xff]
          %v1042 = vld [vmem:[%s421 + $0x8] sm:$0xff]
          %v1043 = vld [vmem:[%s421 + $0x10] sm:$0xff]
          %v1044 = vld [vmem:[%s421 + $0x18] sm:$0xff]
          %v1045 = vld [vmem:[%s421 + $0x20] sm:$0xff]
          %v1046 = vld [vmem:[%s421 + $0x28] sm:$0xff]
          %v1047 = vld [vmem:[%s421 + $0x30] sm:$0xff]
          %v1048 = vld [vmem:[%s421 + $0x38] sm:$0xff]
          %v1049 = vld [vmem:[%s421 + $0x40] sm:$0xff]
          %v1050 = vld [vmem:[%s421 + $0x48] sm:$0xff]
          %v1051 = vld [vmem:[%s421 + $0x50] sm:$0xff]
          %v1052 = vld [vmem:[%s421 + $0x58] sm:$0xff]
          %v1053 = vld [vmem:[%s421 + $0x60] sm:$0xff]
          %v1054 = vld [vmem:[%s421 + $0x68] sm:$0xff]
          %v1055 = vld [vmem:[%s421 + $0x70] sm:$0xff]
          %v1056 = vld [vmem:[%s421 + $0x78] sm:$0xff]
          %v1057 = vld [vmem:[%s421 + $0x80] sm:$0xff]
          %v1058 = vld [vmem:[%s421 + $0x88] sm:$0xff]
          %v1059 = vld [vmem:[%s421 + $0x90] sm:$0xff]
          %v1060 = vld [vmem:[%s421 + $0x98] sm:$0xff]
          %v1061 = vld [vmem:[%s421 + $0xa0] sm:$0xff]
          %v1062 = vld [vmem:[%s421 + $0xa8] sm:$0xff]
          %v1063 = vld [vmem:[%s421 + $0xb0] sm:$0xff]
          %v1064 = vld [vmem:[%s421 + $0xb8] sm:$0xff]
          %v1065 = vld [vmem:[%s421 + $0xc0] sm:$0xff]
          %v1066 = vld [vmem:[%s421 + $0xc8] sm:$0xff]
          %v1067 = vld [vmem:[%s421 + $0xd0] sm:$0xff]
          %v1068 = vld [vmem:[%s421 + $0xd8] sm:$0xff]
          %v1069 = vld [vmem:[%s421 + $0xe0] sm:$0xff]
          %v1070 = vld [vmem:[%s421 + $0xe8] sm:$0xff]
          %v1071 = vld [vmem:[%s421 + $0xf0] sm:$0xff]
          %v1072 = vld [vmem:[%s421 + $0xf8] sm:$0xff]
          %1074 = vset.pattern.permute.xlu0 0
          %1075 = vperm.xlu0 %1074, %v1041
          %v1076 = vpop.permute.xlu0 %1075
          %1079 = vset.pattern.permute.xlu0 0
          %1080 = vperm.xlu0 %1079, %v1042
          %v1081 = vpop.permute.xlu0 %1080
          %1084 = vset.pattern.permute.xlu0 0
          %1085 = vperm.xlu0 %1084, %v1043
          %v1086 = vpop.permute.xlu0 %1085
          %1089 = vset.pattern.permute.xlu0 0
          %1090 = vperm.xlu0 %1089, %v1044
          %v1091 = vpop.permute.xlu0 %1090
          %1094 = vset.pattern.permute.xlu0 0
          %1095 = vperm.xlu0 %1094, %v1045
          %v1096 = vpop.permute.xlu0 %1095
          %1099 = vset.pattern.permute.xlu0 0
          %1100 = vperm.xlu0 %1099, %v1046
          %v1101 = vpop.permute.xlu0 %1100
          %1104 = vset.pattern.permute.xlu0 0
          %1105 = vperm.xlu0 %1104, %v1047
          %v1106 = vpop.permute.xlu0 %1105
          %1109 = vset.pattern.permute.xlu0 0
          %1110 = vperm.xlu0 %1109, %v1048
          %v1111 = vpop.permute.xlu0 %1110
          %1114 = vset.pattern.permute.xlu0 0
          %1115 = vperm.xlu0 %1114, %v1049
          %v1116 = vpop.permute.xlu0 %1115
          %1119 = vset.pattern.permute.xlu0 0
          %1120 = vperm.xlu0 %1119, %v1050
          %v1121 = vpop.permute.xlu0 %1120
          %1124 = vset.pattern.permute.xlu0 0
          %1125 = vperm.xlu0 %1124, %v1051
          %v1126 = vpop.permute.xlu0 %1125
          %1129 = vset.pattern.permute.xlu0 0
          %1130 = vperm.xlu0 %1129, %v1052
          %v1131 = vpop.permute.xlu0 %1130
          %1134 = vset.pattern.permute.xlu0 0
          %1135 = vperm.xlu0 %1134, %v1053
          %v1136 = vpop.permute.xlu0 %1135
          %1139 = vset.pattern.permute.xlu0 0
          %1140 = vperm.xlu0 %1139, %v1054
          %v1141 = vpop.permute.xlu0 %1140
          %1144 = vset.pattern.permute.xlu0 0
          %1145 = vperm.xlu0 %1144, %v1055
          %v1146 = vpop.permute.xlu0 %1145
          %1149 = vset.pattern.permute.xlu0 0
          %1150 = vperm.xlu0 %1149, %v1056
          %v1151 = vpop.permute.xlu0 %1150
          %1154 = vset.pattern.permute.xlu0 0
          %1155 = vperm.xlu0 %1154, %v1057
          %v1156 = vpop.permute.xlu0 %1155
          %1159 = vset.pattern.permute.xlu0 0
          %1160 = vperm.xlu0 %1159, %v1058
          %v1161 = vpop.permute.xlu0 %1160
          %1164 = vset.pattern.permute.xlu0 0
          %1165 = vperm.xlu0 %1164, %v1059
          %v1166 = vpop.permute.xlu0 %1165
          %1169 = vset.pattern.permute.xlu0 0
          %1170 = vperm.xlu0 %1169, %v1060
          %v1171 = vpop.permute.xlu0 %1170
          %1174 = vset.pattern.permute.xlu0 0
          %1175 = vperm.xlu0 %1174, %v1061
          %v1176 = vpop.permute.xlu0 %1175
          %1179 = vset.pattern.permute.xlu0 0
          %1180 = vperm.xlu0 %1179, %v1062
          %v1181 = vpop.permute.xlu0 %1180
          %1184 = vset.pattern.permute.xlu0 0
          %1185 = vperm.xlu0 %1184, %v1063
          %v1186 = vpop.permute.xlu0 %1185
          %1189 = vset.pattern.permute.xlu0 0
          %1190 = vperm.xlu0 %1189, %v1064
          %v1191 = vpop.permute.xlu0 %1190
          %1194 = vset.pattern.permute.xlu0 0
          %1195 = vperm.xlu0 %1194, %v1065
          %v1196 = vpop.permute.xlu0 %1195
          %1199 = vset.pattern.permute.xlu0 0
          %1200 = vperm.xlu0 %1199, %v1066
          %v1201 = vpop.permute.xlu0 %1200
          %1204 = vset.pattern.permute.xlu0 0
          %1205 = vperm.xlu0 %1204, %v1067
          %v1206 = vpop.permute.xlu0 %1205
          %1209 = vset.pattern.permute.xlu0 0
          %1210 = vperm.xlu0 %1209, %v1068
          %v1211 = vpop.permute.xlu0 %1210
          %1214 = vset.pattern.permute.xlu0 0
          %1215 = vperm.xlu0 %1214, %v1069
          %v1216 = vpop.permute.xlu0 %1215
          %1219 = vset.pattern.permute.xlu0 0
          %1220 = vperm.xlu0 %1219, %v1070
          %v1221 = vpop.permute.xlu0 %1220
          %1224 = vset.pattern.permute.xlu0 0
          %1225 = vperm.xlu0 %1224, %v1071
          %v1226 = vpop.permute.xlu0 %1225
          %1229 = vset.pattern.permute.xlu0 0
          %1230 = vperm.xlu0 %1229, %v1072
          %v1231 = vpop.permute.xlu0 %1230
          %v1233 = vmul.f32 %v1009, %v1076
          %v1234 = vmul.f32 %v1010, %v1081
          %v1235 = vmul.f32 %v1011, %v1086
          %v1236 = vmul.f32 %v1012, %v1091
          %v1237 = vmul.f32 %v1013, %v1096
          %v1238 = vmul.f32 %v1014, %v1101
          %v1239 = vmul.f32 %v1015, %v1106
          %v1240 = vmul.f32 %v1016, %v1111
          %v1241 = vmul.f32 %v1017, %v1116
          %v1242 = vmul.f32 %v1018, %v1121
          %v1243 = vmul.f32 %v1019, %v1126
          %v1244 = vmul.f32 %v1020, %v1131
          %v1245 = vmul.f32 %v1021, %v1136
          %v1246 = vmul.f32 %v1022, %v1141
          %v1247 = vmul.f32 %v1023, %v1146
          %v1248 = vmul.f32 %v1024, %v1151
          %v1249 = vmul.f32 %v1025, %v1156
          %v1250 = vmul.f32 %v1026, %v1161
          %v1251 = vmul.f32 %v1027, %v1166
          %v1252 = vmul.f32 %v1028, %v1171
          %v1253 = vmul.f32 %v1029, %v1176
          %v1254 = vmul.f32 %v1030, %v1181
          %v1255 = vmul.f32 %v1031, %v1186
          %v1256 = vmul.f32 %v1032, %v1191
          %v1257 = vmul.f32 %v1033, %v1196
          %v1258 = vmul.f32 %v1034, %v1201
          %v1259 = vmul.f32 %v1035, %v1206
          %v1260 = vmul.f32 %v1036, %v1211
          %v1261 = vmul.f32 %v1037, %v1216
          %v1262 = vmul.f32 %v1038, %v1221
          %v1263 = vmul.f32 %v1039, %v1226
          %v1264 = vmul.f32 %v1040, %v1231
          %s1265 = smul.u32 %s26, 256
          %s1266 = sadd.s32 %s566, %s1265
          %s1267 = sshra.s32 %s1266, 3
          %s1268 = sand.u32 %s1266, 7
          %s1269 = smul.addr %s1267, 4
          %s1270 = scalar_lea.vmem [#allocation3], %s1269
          %v1271 = vld [vmem:[%s1270] sm:$0xf]
          %v1272 = vld [vmem:[%s1270 + $0x4] sm:$0xf]
          %v1273 = vld [vmem:[%s1270 + $0x8] sm:$0xf]
          %v1274 = vld [vmem:[%s1270 + $0xc] sm:$0xf]
          %v1275 = vld [vmem:[%s1270 + $0x10] sm:$0xf]
          %v1276 = vld [vmem:[%s1270 + $0x14] sm:$0xf]
          %v1277 = vld [vmem:[%s1270 + $0x18] sm:$0xf]
          %v1278 = vld [vmem:[%s1270 + $0x1c] sm:$0xf]
          %v1279 = vld [vmem:[%s1270 + $0x20] sm:$0xf]
          %v1280 = vld [vmem:[%s1270 + $0x24] sm:$0xf]
          %v1281 = vld [vmem:[%s1270 + $0x28] sm:$0xf]
          %v1282 = vld [vmem:[%s1270 + $0x2c] sm:$0xf]
          %v1283 = vld [vmem:[%s1270 + $0x30] sm:$0xf]
          %v1284 = vld [vmem:[%s1270 + $0x34] sm:$0xf]
          %v1285 = vld [vmem:[%s1270 + $0x38] sm:$0xf]
          %v1286 = vld [vmem:[%s1270 + $0x3c] sm:$0xf]
          %v1287 = vld [vmem:[%s1270 + $0x40] sm:$0xf]
          %v1288 = vld [vmem:[%s1270 + $0x44] sm:$0xf]
          %v1289 = vld [vmem:[%s1270 + $0x48] sm:$0xf]
          %v1290 = vld [vmem:[%s1270 + $0x4c] sm:$0xf]
          %v1291 = vld [vmem:[%s1270 + $0x50] sm:$0xf]
          %v1292 = vld [vmem:[%s1270 + $0x54] sm:$0xf]
          %v1293 = vld [vmem:[%s1270 + $0x58] sm:$0xf]
          %v1294 = vld [vmem:[%s1270 + $0x5c] sm:$0xf]
          %v1295 = vld [vmem:[%s1270 + $0x60] sm:$0xf]
          %v1296 = vld [vmem:[%s1270 + $0x64] sm:$0xf]
          %v1297 = vld [vmem:[%s1270 + $0x68] sm:$0xf]
          %v1298 = vld [vmem:[%s1270 + $0x6c] sm:$0xf]
          %v1299 = vld [vmem:[%s1270 + $0x70] sm:$0xf]
          %v1300 = vld [vmem:[%s1270 + $0x74] sm:$0xf]
          %v1301 = vld [vmem:[%s1270 + $0x78] sm:$0xf]
          %v1302 = vld [vmem:[%s1270 + $0x7c] sm:$0xf]
          %v1303 = vpack.c.bf16 %v1234, %v1233
          %v1304 = vpack.c.bf16 %v1236, %v1235
          %v1305 = vpack.c.bf16 %v1238, %v1237
          %v1306 = vpack.c.bf16 %v1240, %v1239
          %v1307 = vpack.c.bf16 %v1242, %v1241
          %v1308 = vpack.c.bf16 %v1244, %v1243
          %v1309 = vpack.c.bf16 %v1246, %v1245
          %v1310 = vpack.c.bf16 %v1248, %v1247
          %v1311 = vpack.c.bf16 %v1250, %v1249
          %v1312 = vpack.c.bf16 %v1252, %v1251
          %v1313 = vpack.c.bf16 %v1254, %v1253
          %v1314 = vpack.c.bf16 %v1256, %v1255
          %v1315 = vpack.c.bf16 %v1258, %v1257
          %v1316 = vpack.c.bf16 %v1260, %v1259
          %v1317 = vpack.c.bf16 %v1262, %v1261
          %v1318 = vpack.c.bf16 %v1264, %v1263
          %v1319 = vld [vmem:[%s427] sm:$0xf]
          %v1320 = vld [vmem:[%s427 + $0x4] sm:$0xf]
          %v1321 = vld [vmem:[%s427 + $0x8] sm:$0xf]
          %v1322 = vld [vmem:[%s427 + $0xc] sm:$0xf]
          %v1323 = vld [vmem:[%s427 + $0x10] sm:$0xf]
          %v1324 = vld [vmem:[%s427 + $0x14] sm:$0xf]
          %v1325 = vld [vmem:[%s427 + $0x18] sm:$0xf]
          %v1326 = vld [vmem:[%s427 + $0x1c] sm:$0xf]
          %v1327 = vld [vmem:[%s427 + $0x20] sm:$0xf]
          %v1328 = vld [vmem:[%s427 + $0x24] sm:$0xf]
          %v1329 = vld [vmem:[%s427 + $0x28] sm:$0xf]
          %v1330 = vld [vmem:[%s427 + $0x2c] sm:$0xf]
          %v1331 = vld [vmem:[%s427 + $0x30] sm:$0xf]
          %v1332 = vld [vmem:[%s427 + $0x34] sm:$0xf]
          %v1333 = vld [vmem:[%s427 + $0x38] sm:$0xf]
          %v1334 = vld [vmem:[%s427 + $0x3c] sm:$0xf]
          %v1335 = vld [vmem:[%s364] sm:$0xf]
          %v1336 = vld [vmem:[%s364 + $0x4] sm:$0xf]
          %v1337 = vld [vmem:[%s364 + $0x8] sm:$0xf]
          %v1338 = vld [vmem:[%s364 + $0xc] sm:$0xf]
          %v1339 = vld [vmem:[%s364 + $0x10] sm:$0xf]
          %v1340 = vld [vmem:[%s364 + $0x14] sm:$0xf]
          %v1341 = vld [vmem:[%s364 + $0x18] sm:$0xf]
          %v1342 = vld [vmem:[%s364 + $0x1c] sm:$0xf]
          %v1343 = vld [vmem:[%s364 + $0x20] sm:$0xf]
          %v1344 = vld [vmem:[%s364 + $0x24] sm:$0xf]
          %v1345 = vld [vmem:[%s364 + $0x28] sm:$0xf]
          %v1346 = vld [vmem:[%s364 + $0x2c] sm:$0xf]
          %v1347 = vld [vmem:[%s364 + $0x30] sm:$0xf]
          %v1348 = vld [vmem:[%s364 + $0x34] sm:$0xf]
          %v1349 = vld [vmem:[%s364 + $0x38] sm:$0xf]
          %v1350 = vld [vmem:[%s364 + $0x3c] sm:$0xf]
          %v1383 = vunpack.c.l.b16 %v1271
          %v1384 = vunpack.c.l.b16 %v1272
          %v1385 = vunpack.c.l.b16 %v1273
          %v1386 = vunpack.c.l.b16 %v1274
          %v1387 = vunpack.c.l.b16 %v1275
          %v1388 = vunpack.c.l.b16 %v1276
          %v1389 = vunpack.c.l.b16 %v1277
          %v1390 = vunpack.c.l.b16 %v1278
          %v1391 = vunpack.c.l.b16 %v1279
          %v1392 = vunpack.c.l.b16 %v1280
          %v1393 = vunpack.c.l.b16 %v1281
          %v1394 = vunpack.c.l.b16 %v1282
          %v1395 = vunpack.c.l.b16 %v1283
          %v1396 = vunpack.c.l.b16 %v1284
          %v1397 = vunpack.c.l.b16 %v1285
          %v1398 = vunpack.c.l.b16 %v1286
          %v1399 = vunpack.c.l.b16 %v1287
          %v1400 = vunpack.c.l.b16 %v1288
          %v1401 = vunpack.c.l.b16 %v1289
          %v1402 = vunpack.c.l.b16 %v1290
          %v1403 = vunpack.c.l.b16 %v1291
          %v1404 = vunpack.c.l.b16 %v1292
          %v1405 = vunpack.c.l.b16 %v1293
          %v1406 = vunpack.c.l.b16 %v1294
          %v1407 = vunpack.c.l.b16 %v1295
          %v1408 = vunpack.c.l.b16 %v1296
          %v1409 = vunpack.c.l.b16 %v1297
          %v1410 = vunpack.c.l.b16 %v1298
          %v1411 = vunpack.c.l.b16 %v1299
          %v1412 = vunpack.c.l.b16 %v1300
          %v1413 = vunpack.c.l.b16 %v1301
          %v1414 = vunpack.c.l.b16 %v1302
          %v1415 = vpack.c.b16 %v1384, %v1383
          %v1416 = vpack.c.b16 %v1386, %v1385
          %v1417 = vpack.c.b16 %v1388, %v1387
          %v1418 = vpack.c.b16 %v1390, %v1389
          %v1419 = vpack.c.b16 %v1392, %v1391
          %v1420 = vpack.c.b16 %v1394, %v1393
          %v1421 = vpack.c.b16 %v1396, %v1395
          %v1422 = vpack.c.b16 %v1398, %v1397
          %v1423 = vpack.c.b16 %v1400, %v1399
          %v1424 = vpack.c.b16 %v1402, %v1401
          %v1425 = vpack.c.b16 %v1404, %v1403
          %v1426 = vpack.c.b16 %v1406, %v1405
          %v1427 = vpack.c.b16 %v1408, %v1407
          %v1428 = vpack.c.b16 %v1410, %v1409
          %v1429 = vpack.c.b16 %v1412, %v1411
          %v1430 = vpack.c.b16 %v1414, %v1413
          %v1463 = vunpack.c.l.b16 %v1335
          %v1464 = vunpack.c.l.b16 %v1336
          %v1465 = vunpack.c.l.b16 %v1337
          %v1466 = vunpack.c.l.b16 %v1338
          %v1467 = vunpack.c.l.b16 %v1339
          %v1468 = vunpack.c.l.b16 %v1340
          %v1469 = vunpack.c.l.b16 %v1341
          %v1470 = vunpack.c.l.b16 %v1342
          %v1471 = vunpack.c.l.b16 %v1343
          %v1472 = vunpack.c.l.b16 %v1344
          %v1473 = vunpack.c.l.b16 %v1345
          %v1474 = vunpack.c.l.b16 %v1346
          %v1475 = vunpack.c.l.b16 %v1347
          %v1476 = vunpack.c.l.b16 %v1348
          %v1477 = vunpack.c.l.b16 %v1349
          %v1478 = vunpack.c.l.b16 %v1350
          %v1479 = vpack.c.b16 %v1464, %v1463
          %v1480 = vpack.c.b16 %v1466, %v1465
          %v1481 = vpack.c.b16 %v1468, %v1467
          %v1482 = vpack.c.b16 %v1470, %v1469
          %v1483 = vpack.c.b16 %v1472, %v1471
          %v1484 = vpack.c.b16 %v1474, %v1473
          %v1485 = vpack.c.b16 %v1476, %v1475
          %v1486 = vpack.c.b16 %v1478, %v1477
          %1495 = vmatprep.subr.bf16.mxu0 0
          %1496 = vmatpush1.bf16.msra.mxu0 %v1486
          %1497 = vmatprep.subr.bf16.mxu0 0
          %1498 = vmatpush1.bf16.msra.mxu0 %v1485
          %1499 = vmatprep.subr.bf16.mxu0 0
          %1500 = vmatpush1.bf16.msra.mxu0 %v1484
          %1501 = vmatprep.subr.bf16.mxu0 0
          %1502 = vmatpush1.bf16.msra.mxu0 %v1483
          %1503 = vmatprep.subr.bf16.mxu0 0
          %1504 = vmatpush1.bf16.msra.mxu0 %v1482
          %1505 = vmatprep.subr.bf16.mxu0 0
          %1506 = vmatpush1.bf16.msra.mxu0 %v1481
          %1507 = vmatprep.subr.bf16.mxu0 0
          %1508 = vmatpush1.bf16.msra.mxu0 %v1480
          %1509 = vmatprep.subr.bf16.mxu0 0
          %1510 = vmatpush1.bf16.msra.mxu0 %v1479
          %1511 = vmatprep.subr.bf16.mxu0 0
          %1512 = vmatpush2.bf16.msra.mxu0 0
          %1513 = vmatprep.subr.bf16.mxu0 0
          %1514 = vmatpush2.bf16.msra.mxu0 0
          %1515 = vmatprep.subr.bf16.mxu0 0
          %1516 = vmatpush2.bf16.msra.mxu0 0
          %1517 = vmatprep.subr.bf16.mxu0 0
          %1518 = vmatpush2.bf16.msra.mxu0 0
          %1519 = vmatprep.subr.bf16.mxu0 0
          %1520 = vmatpush2.bf16.msra.mxu0 0
          %1521 = vmatprep.subr.bf16.mxu0 0
          %1522 = vmatpush2.bf16.msra.mxu0 0
          %1523 = vmatprep.subr.bf16.mxu0 0
          %1524 = vmatpush2.bf16.msra.mxu0 0
          %1525 = vmatprep.subr.bf16.mxu0 0
          %1526 = vmatpush2.bf16.msra.mxu0 0
          %1527 = vmatprep.mubr.bf16.mxu0 0
          %1528 = vmatmul.mubr.bf16.gmra.mxu0 %v1415
          %v1529 = vpop.f32.mrf.mxu0
          %v1530 = vadd.f32 0.0, %v1529
          %v1531 = vpop.f32.mrf.mxu0
          %v1532 = vpop.f32.mrf.mxu0
          %v1533 = vadd.f32 0.0, %v1532
          %v1534 = vpop.f32.mrf.mxu0
          %1535 = vmatprep.mubr.bf16.mxu0 0
          %1536 = vmatmul.mubr.bf16.gmra.mxu0 %v1416
          %v1537 = vpop.f32.mrf.mxu0
          %v1538 = vadd.f32 0.0, %v1537
          %v1539 = vpop.f32.mrf.mxu0
          %v1540 = vpop.f32.mrf.mxu0
          %v1541 = vadd.f32 0.0, %v1540
          %v1542 = vpop.f32.mrf.mxu0
          %1543 = vmatprep.mubr.bf16.mxu0 0
          %1544 = vmatmul.mubr.bf16.gmra.mxu0 %v1417
          %v1545 = vpop.f32.mrf.mxu0
          %v1546 = vadd.f32 0.0, %v1545
          %v1547 = vpop.f32.mrf.mxu0
          %v1548 = vpop.f32.mrf.mxu0
          %v1549 = vadd.f32 0.0, %v1548
          %v1550 = vpop.f32.mrf.mxu0
          %1551 = vmatprep.mubr.bf16.mxu0 0
          %1552 = vmatmul.mubr.bf16.gmra.mxu0 %v1418
          %v1553 = vpop.f32.mrf.mxu0
          %v1554 = vadd.f32 0.0, %v1553
          %v1555 = vpop.f32.mrf.mxu0
          %v1556 = vpop.f32.mrf.mxu0
          %v1557 = vadd.f32 0.0, %v1556
          %v1558 = vpop.f32.mrf.mxu0
          %1559 = vmatprep.mubr.bf16.mxu0 0
          %1560 = vmatmul.mubr.bf16.gmra.mxu0 %v1419
          %v1561 = vpop.f32.mrf.mxu0
          %v1562 = vadd.f32 0.0, %v1561
          %v1563 = vpop.f32.mrf.mxu0
          %v1564 = vpop.f32.mrf.mxu0
          %v1565 = vadd.f32 0.0, %v1564
          %v1566 = vpop.f32.mrf.mxu0
          %1567 = vmatprep.mubr.bf16.mxu0 0
          %1568 = vmatmul.mubr.bf16.gmra.mxu0 %v1420
          %v1569 = vpop.f32.mrf.mxu0
          %v1570 = vadd.f32 0.0, %v1569
          %v1571 = vpop.f32.mrf.mxu0
          %v1572 = vpop.f32.mrf.mxu0
          %v1573 = vadd.f32 0.0, %v1572
          %v1574 = vpop.f32.mrf.mxu0
          %1575 = vmatprep.mubr.bf16.mxu0 0
          %1576 = vmatmul.mubr.bf16.gmra.mxu0 %v1421
          %v1577 = vpop.f32.mrf.mxu0
          %v1578 = vadd.f32 0.0, %v1577
          %v1579 = vpop.f32.mrf.mxu0
          %v1580 = vpop.f32.mrf.mxu0
          %v1581 = vadd.f32 0.0, %v1580
          %v1582 = vpop.f32.mrf.mxu0
          %1583 = vmatprep.mubr.bf16.mxu0 0
          %1584 = vmatmul.mubr.bf16.gmra.mxu0 %v1422
          %v1585 = vpop.f32.mrf.mxu0
          %v1586 = vadd.f32 0.0, %v1585
          %v1587 = vpop.f32.mrf.mxu0
          %v1588 = vpop.f32.mrf.mxu0
          %v1589 = vadd.f32 0.0, %v1588
          %v1590 = vpop.f32.mrf.mxu0
          %1591 = vmatprep.mubr.bf16.mxu0 0
          %1592 = vmatmul.mubr.bf16.gmra.mxu0 %v1423
          %v1593 = vpop.f32.mrf.mxu0
          %v1594 = vadd.f32 0.0, %v1593
          %v1595 = vpop.f32.mrf.mxu0
          %v1596 = vpop.f32.mrf.mxu0
          %v1597 = vadd.f32 0.0, %v1596
          %v1598 = vpop.f32.mrf.mxu0
          %1599 = vmatprep.mubr.bf16.mxu0 0
          %1600 = vmatmul.mubr.bf16.gmra.mxu0 %v1424
          %v1601 = vpop.f32.mrf.mxu0
          %v1602 = vadd.f32 0.0, %v1601
          %v1603 = vpop.f32.mrf.mxu0
          %v1604 = vpop.f32.mrf.mxu0
          %v1605 = vadd.f32 0.0, %v1604
          %v1606 = vpop.f32.mrf.mxu0
          %1607 = vmatprep.mubr.bf16.mxu0 0
          %1608 = vmatmul.mubr.bf16.gmra.mxu0 %v1425
          %v1609 = vpop.f32.mrf.mxu0
          %v1610 = vadd.f32 0.0, %v1609
          %v1611 = vpop.f32.mrf.mxu0
          %v1612 = vpop.f32.mrf.mxu0
          %v1613 = vadd.f32 0.0, %v1612
          %v1614 = vpop.f32.mrf.mxu0
          %1615 = vmatprep.mubr.bf16.mxu0 0
          %1616 = vmatmul.mubr.bf16.gmra.mxu0 %v1426
          %v1617 = vpop.f32.mrf.mxu0
          %v1618 = vadd.f32 0.0, %v1617
          %v1619 = vpop.f32.mrf.mxu0
          %v1620 = vpop.f32.mrf.mxu0
          %v1621 = vadd.f32 0.0, %v1620
          %v1622 = vpop.f32.mrf.mxu0
          %1623 = vmatprep.mubr.bf16.mxu0 0
          %1624 = vmatmul.mubr.bf16.gmra.mxu0 %v1427
          %v1625 = vpop.f32.mrf.mxu0
          %v1626 = vadd.f32 0.0, %v1625
          %v1627 = vpop.f32.mrf.mxu0
          %v1628 = vpop.f32.mrf.mxu0
          %v1629 = vadd.f32 0.0, %v1628
          %v1630 = vpop.f32.mrf.mxu0
          %1631 = vmatprep.mubr.bf16.mxu0 0
          %1632 = vmatmul.mubr.bf16.gmra.mxu0 %v1428
          %v1633 = vpop.f32.mrf.mxu0
          %v1634 = vadd.f32 0.0, %v1633
          %v1635 = vpop.f32.mrf.mxu0
          %v1636 = vpop.f32.mrf.mxu0
          %v1637 = vadd.f32 0.0, %v1636
          %v1638 = vpop.f32.mrf.mxu0
          %1639 = vmatprep.mubr.bf16.mxu0 0
          %1640 = vmatmul.mubr.bf16.gmra.mxu0 %v1429
          %v1641 = vpop.f32.mrf.mxu0
          %v1642 = vadd.f32 0.0, %v1641
          %v1643 = vpop.f32.mrf.mxu0
          %v1644 = vpop.f32.mrf.mxu0
          %v1645 = vadd.f32 0.0, %v1644
          %v1646 = vpop.f32.mrf.mxu0
          %1647 = vmatprep.mubr.bf16.mxu0 0
          %1648 = vmatmul.mubr.bf16.gmra.mxu0 %v1430
          %v1649 = vpop.f32.mrf.mxu0
          %v1650 = vadd.f32 0.0, %v1649
          %v1651 = vpop.f32.mrf.mxu0
          %v1652 = vpop.f32.mrf.mxu0
          %v1653 = vadd.f32 0.0, %v1652
          %v1654 = vpop.f32.mrf.mxu0
          %1655 = vdwg.mxu0
          %v1672 = vunpack.c.l.b16 %v1319
          %v1673 = vunpack.c.l.b16 %v1320
          %v1674 = vunpack.c.l.b16 %v1321
          %v1675 = vunpack.c.l.b16 %v1322
          %v1676 = vunpack.c.l.b16 %v1323
          %v1677 = vunpack.c.l.b16 %v1324
          %v1678 = vunpack.c.l.b16 %v1325
          %v1679 = vunpack.c.l.b16 %v1326
          %v1680 = vunpack.c.l.b16 %v1327
          %v1681 = vunpack.c.l.b16 %v1328
          %v1682 = vunpack.c.l.b16 %v1329
          %v1683 = vunpack.c.l.b16 %v1330
          %v1684 = vunpack.c.l.b16 %v1331
          %v1685 = vunpack.c.l.b16 %v1332
          %v1686 = vunpack.c.l.b16 %v1333
          %v1687 = vunpack.c.l.b16 %v1334
          %v1688 = vpack.c.b16 %v1673, %v1672
          %v1689 = vpack.c.b16 %v1675, %v1674
          %v1690 = vpack.c.b16 %v1677, %v1676
          %v1691 = vpack.c.b16 %v1679, %v1678
          %v1692 = vpack.c.b16 %v1681, %v1680
          %v1693 = vpack.c.b16 %v1683, %v1682
          %v1694 = vpack.c.b16 %v1685, %v1684
          %v1695 = vpack.c.b16 %v1687, %v1686
          %1704 = vmatprep.subr.bf16.mxu0 0
          %1705 = vmatpush1.bf16.msra.mxu0 %v1695
          %1706 = vmatprep.subr.bf16.mxu0 0
          %1707 = vmatpush1.bf16.msra.mxu0 %v1694
          %1708 = vmatprep.subr.bf16.mxu0 0
          %1709 = vmatpush1.bf16.msra.mxu0 %v1693
          %1710 = vmatprep.subr.bf16.mxu0 0
          %1711 = vmatpush1.bf16.msra.mxu0 %v1692
          %1712 = vmatprep.subr.bf16.mxu0 0
          %1713 = vmatpush1.bf16.msra.mxu0 %v1691
          %1714 = vmatprep.subr.bf16.mxu0 0
          %1715 = vmatpush1.bf16.msra.mxu0 %v1690
          %1716 = vmatprep.subr.bf16.mxu0 0
          %1717 = vmatpush1.bf16.msra.mxu0 %v1689
          %1718 = vmatprep.subr.bf16.mxu0 0
          %1719 = vmatpush1.bf16.msra.mxu0 %v1688
          %1720 = vmatprep.subr.bf16.mxu0 0
          %1721 = vmatpush2.bf16.msra.mxu0 0
          %1722 = vmatprep.subr.bf16.mxu0 0
          %1723 = vmatpush2.bf16.msra.mxu0 0
          %1724 = vmatprep.subr.bf16.mxu0 0
          %1725 = vmatpush2.bf16.msra.mxu0 0
          %1726 = vmatprep.subr.bf16.mxu0 0
          %1727 = vmatpush2.bf16.msra.mxu0 0
          %1728 = vmatprep.subr.bf16.mxu0 0
          %1729 = vmatpush2.bf16.msra.mxu0 0
          %1730 = vmatprep.subr.bf16.mxu0 0
          %1731 = vmatpush2.bf16.msra.mxu0 0
          %1732 = vmatprep.subr.bf16.mxu0 0
          %1733 = vmatpush2.bf16.msra.mxu0 0
          %1734 = vmatprep.subr.bf16.mxu0 0
          %1735 = vmatpush2.bf16.msra.mxu0 0
          %1736 = vmatprep.mubr.bf16.mxu0 0
          %1737 = vmatmul.mubr.bf16.gmra.mxu0 %v1303
          %v1738 = vpop.f32.mrf.mxu0
          %v1739 = vadd.f32 %v1530, %v1738
          %v1740 = vpop.f32.mrf.mxu0
          %v1741 = vpop.f32.mrf.mxu0
          %v1742 = vadd.f32 %v1533, %v1741
          %v1743 = vpop.f32.mrf.mxu0
          %1744 = vmatprep.mubr.bf16.mxu0 0
          %1745 = vmatmul.mubr.bf16.gmra.mxu0 %v1304
          %v1746 = vpop.f32.mrf.mxu0
          %v1747 = vadd.f32 %v1538, %v1746
          %v1748 = vpop.f32.mrf.mxu0
          %v1749 = vpop.f32.mrf.mxu0
          %v1750 = vadd.f32 %v1541, %v1749
          %v1751 = vpop.f32.mrf.mxu0
          %1752 = vmatprep.mubr.bf16.mxu0 0
          %1753 = vmatmul.mubr.bf16.gmra.mxu0 %v1305
          %v1754 = vpop.f32.mrf.mxu0
          %v1755 = vadd.f32 %v1546, %v1754
          %v1756 = vpop.f32.mrf.mxu0
          %v1757 = vpop.f32.mrf.mxu0
          %v1758 = vadd.f32 %v1549, %v1757
          %v1759 = vpop.f32.mrf.mxu0
          %1760 = vmatprep.mubr.bf16.mxu0 0
          %1761 = vmatmul.mubr.bf16.gmra.mxu0 %v1306
          %v1762 = vpop.f32.mrf.mxu0
          %v1763 = vadd.f32 %v1554, %v1762
          %v1764 = vpop.f32.mrf.mxu0
          %v1765 = vpop.f32.mrf.mxu0
          %v1766 = vadd.f32 %v1557, %v1765
          %v1767 = vpop.f32.mrf.mxu0
          %1768 = vmatprep.mubr.bf16.mxu0 0
          %1769 = vmatmul.mubr.bf16.gmra.mxu0 %v1307
          %v1770 = vpop.f32.mrf.mxu0
          %v1771 = vadd.f32 %v1562, %v1770
          %v1772 = vpop.f32.mrf.mxu0
          %v1773 = vpop.f32.mrf.mxu0
          %v1774 = vadd.f32 %v1565, %v1773
          %v1775 = vpop.f32.mrf.mxu0
          %1776 = vmatprep.mubr.bf16.mxu0 0
          %1777 = vmatmul.mubr.bf16.gmra.mxu0 %v1308
          %v1778 = vpop.f32.mrf.mxu0
          %v1779 = vadd.f32 %v1570, %v1778
          %v1780 = vpop.f32.mrf.mxu0
          %v1781 = vpop.f32.mrf.mxu0
          %v1782 = vadd.f32 %v1573, %v1781
          %v1783 = vpop.f32.mrf.mxu0
          %1784 = vmatprep.mubr.bf16.mxu0 0
          %1785 = vmatmul.mubr.bf16.gmra.mxu0 %v1309
          %v1786 = vpop.f32.mrf.mxu0
          %v1787 = vadd.f32 %v1578, %v1786
          %v1788 = vpop.f32.mrf.mxu0
          %v1789 = vpop.f32.mrf.mxu0
          %v1790 = vadd.f32 %v1581, %v1789
          %v1791 = vpop.f32.mrf.mxu0
          %1792 = vmatprep.mubr.bf16.mxu0 0
          %1793 = vmatmul.mubr.bf16.gmra.mxu0 %v1310
          %v1794 = vpop.f32.mrf.mxu0
          %v1795 = vadd.f32 %v1586, %v1794
          %v1796 = vpop.f32.mrf.mxu0
          %v1797 = vpop.f32.mrf.mxu0
          %v1798 = vadd.f32 %v1589, %v1797
          %v1799 = vpop.f32.mrf.mxu0
          %1800 = vmatprep.mubr.bf16.mxu0 0
          %1801 = vmatmul.mubr.bf16.gmra.mxu0 %v1311
          %v1802 = vpop.f32.mrf.mxu0
          %v1803 = vadd.f32 %v1594, %v1802
          %v1804 = vpop.f32.mrf.mxu0
          %v1805 = vpop.f32.mrf.mxu0
          %v1806 = vadd.f32 %v1597, %v1805
          %v1807 = vpop.f32.mrf.mxu0
          %1808 = vmatprep.mubr.bf16.mxu0 0
          %1809 = vmatmul.mubr.bf16.gmra.mxu0 %v1312
          %v1810 = vpop.f32.mrf.mxu0
          %v1811 = vadd.f32 %v1602, %v1810
          %v1812 = vpop.f32.mrf.mxu0
          %v1813 = vpop.f32.mrf.mxu0
          %v1814 = vadd.f32 %v1605, %v1813
          %v1815 = vpop.f32.mrf.mxu0
          %1816 = vmatprep.mubr.bf16.mxu0 0
          %1817 = vmatmul.mubr.bf16.gmra.mxu0 %v1313
          %v1818 = vpop.f32.mrf.mxu0
          %v1819 = vadd.f32 %v1610, %v1818
          %v1820 = vpop.f32.mrf.mxu0
          %v1821 = vpop.f32.mrf.mxu0
          %v1822 = vadd.f32 %v1613, %v1821
          %v1823 = vpop.f32.mrf.mxu0
          %1824 = vmatprep.mubr.bf16.mxu0 0
          %1825 = vmatmul.mubr.bf16.gmra.mxu0 %v1314
          %v1826 = vpop.f32.mrf.mxu0
          %v1827 = vadd.f32 %v1618, %v1826
          %v1828 = vpop.f32.mrf.mxu0
          %v1829 = vpop.f32.mrf.mxu0
          %v1830 = vadd.f32 %v1621, %v1829
          %v1831 = vpop.f32.mrf.mxu0
          %1832 = vmatprep.mubr.bf16.mxu0 0
          %1833 = vmatmul.mubr.bf16.gmra.mxu0 %v1315
          %v1834 = vpop.f32.mrf.mxu0
          %v1835 = vadd.f32 %v1626, %v1834
          %v1836 = vpop.f32.mrf.mxu0
          %v1837 = vpop.f32.mrf.mxu0
          %v1838 = vadd.f32 %v1629, %v1837
          %v1839 = vpop.f32.mrf.mxu0
          %1840 = vmatprep.mubr.bf16.mxu0 0
          %1841 = vmatmul.mubr.bf16.gmra.mxu0 %v1316
          %v1842 = vpop.f32.mrf.mxu0
          %v1843 = vadd.f32 %v1634, %v1842
          %v1844 = vpop.f32.mrf.mxu0
          %v1845 = vpop.f32.mrf.mxu0
          %v1846 = vadd.f32 %v1637, %v1845
          %v1847 = vpop.f32.mrf.mxu0
          %1848 = vmatprep.mubr.bf16.mxu0 0
          %1849 = vmatmul.mubr.bf16.gmra.mxu0 %v1317
          %v1850 = vpop.f32.mrf.mxu0
          %v1851 = vadd.f32 %v1642, %v1850
          %v1852 = vpop.f32.mrf.mxu0
          %v1853 = vpop.f32.mrf.mxu0
          %v1854 = vadd.f32 %v1645, %v1853
          %v1855 = vpop.f32.mrf.mxu0
          %1856 = vmatprep.mubr.bf16.mxu0 0
          %1857 = vmatmul.mubr.bf16.gmra.mxu0 %v1318
          %v1858 = vpop.f32.mrf.mxu0
          %v1859 = vadd.f32 %v1650, %v1858
          %v1860 = vpop.f32.mrf.mxu0
          %v1861 = vpop.f32.mrf.mxu0
          %v1862 = vadd.f32 %v1653, %v1861
          %v1863 = vpop.f32.mrf.mxu0
          %1864 = vdwg.mxu0
          %v1865 = vld [vmem:[%s430] sm:$0x1]
          %v1867 = vlaneseq
          %v1868 = vshrl.u32 %v1867, 7
          %v1869 = vsub.s32 0, %v1868
          %v1870 = vrot.slane %v1865, %v1869
          %v1872 = vadd.f32 %v1739, %v1870
          %v1873 = vadd.f32 %v1742, %v1870
          %v1874 = vadd.f32 %v1747, %v1870
          %v1875 = vadd.f32 %v1750, %v1870
          %v1876 = vadd.f32 %v1755, %v1870
          %v1877 = vadd.f32 %v1758, %v1870
          %v1878 = vadd.f32 %v1763, %v1870
          %v1879 = vadd.f32 %v1766, %v1870
          %v1880 = vadd.f32 %v1771, %v1870
          %v1881 = vadd.f32 %v1774, %v1870
          %v1882 = vadd.f32 %v1779, %v1870
          %v1883 = vadd.f32 %v1782, %v1870
          %v1884 = vadd.f32 %v1787, %v1870
          %v1885 = vadd.f32 %v1790, %v1870
          %v1886 = vadd.f32 %v1795, %v1870
          %v1887 = vadd.f32 %v1798, %v1870
          %v1888 = vadd.f32 %v1803, %v1870
          %v1889 = vadd.f32 %v1806, %v1870
          %v1890 = vadd.f32 %v1811, %v1870
          %v1891 = vadd.f32 %v1814, %v1870
          %v1892 = vadd.f32 %v1819, %v1870
          %v1893 = vadd.f32 %v1822, %v1870
          %v1894 = vadd.f32 %v1827, %v1870
          %v1895 = vadd.f32 %v1830, %v1870
          %v1896 = vadd.f32 %v1835, %v1870
          %v1897 = vadd.f32 %v1838, %v1870
          %v1898 = vadd.f32 %v1843, %v1870
          %v1899 = vadd.f32 %v1846, %v1870
          %v1900 = vadd.f32 %v1851, %v1870
          %v1901 = vadd.f32 %v1854, %v1870
          %v1902 = vadd.f32 %v1859, %v1870
          %v1903 = vadd.f32 %v1862, %v1870
          %v1904 = vmax.f32 %v1872, 0.0
          %v1905 = vmax.f32 %v1873, 0.0
          %v1906 = vmax.f32 %v1874, 0.0
          %v1907 = vmax.f32 %v1875, 0.0
          %v1908 = vmax.f32 %v1876, 0.0
          %v1909 = vmax.f32 %v1877, 0.0
          %v1910 = vmax.f32 %v1878, 0.0
          %v1911 = vmax.f32 %v1879, 0.0
          %v1912 = vmax.f32 %v1880, 0.0
          %v1913 = vmax.f32 %v1881, 0.0
          %v1914 = vmax.f32 %v1882, 0.0
          %v1915 = vmax.f32 %v1883, 0.0
          %v1916 = vmax.f32 %v1884, 0.0
          %v1917 = vmax.f32 %v1885, 0.0
          %v1918 = vmax.f32 %v1886, 0.0
          %v1919 = vmax.f32 %v1887, 0.0
          %v1920 = vmax.f32 %v1888, 0.0
          %v1921 = vmax.f32 %v1889, 0.0
          %v1922 = vmax.f32 %v1890, 0.0
          %v1923 = vmax.f32 %v1891, 0.0
          %v1924 = vmax.f32 %v1892, 0.0
          %v1925 = vmax.f32 %v1893, 0.0
          %v1926 = vmax.f32 %v1894, 0.0
          %v1927 = vmax.f32 %v1895, 0.0
          %v1928 = vmax.f32 %v1896, 0.0
          %v1929 = vmax.f32 %v1897, 0.0
          %v1930 = vmax.f32 %v1898, 0.0
          %v1931 = vmax.f32 %v1899, 0.0
          %v1932 = vmax.f32 %v1900, 0.0
          %v1933 = vmax.f32 %v1901, 0.0
          %v1934 = vmax.f32 %v1902, 0.0
          %v1935 = vmax.f32 %v1903, 0.0
          %v1936 = vpack.c.bf16 %v1905, %v1904
          %v1937 = vpack.c.bf16 %v1907, %v1906
          %v1938 = vpack.c.bf16 %v1909, %v1908
          %v1939 = vpack.c.bf16 %v1911, %v1910
          %v1940 = vpack.c.bf16 %v1913, %v1912
          %v1941 = vpack.c.bf16 %v1915, %v1914
          %v1942 = vpack.c.bf16 %v1917, %v1916
          %v1943 = vpack.c.bf16 %v1919, %v1918
          %v1944 = vpack.c.bf16 %v1921, %v1920
          %v1945 = vpack.c.bf16 %v1923, %v1922
          %v1946 = vpack.c.bf16 %v1925, %v1924
          %v1947 = vpack.c.bf16 %v1927, %v1926
          %v1948 = vpack.c.bf16 %v1929, %v1928
          %v1949 = vpack.c.bf16 %v1931, %v1930
          %v1950 = vpack.c.bf16 %v1933, %v1932
          %v1951 = vpack.c.bf16 %v1935, %v1934
          %s1952 = smul.u32 %s565, 256
          %s1953 = sadd.s32 %s1952, %s1265
          %v1970 = vunpack.c.l.b16 %v1936
          %v1971 = vunpack.c.h.b16 %v1936
          %v1972 = vunpack.c.l.b16 %v1937
          %v1973 = vunpack.c.h.b16 %v1937
          %v1974 = vunpack.c.l.b16 %v1938
          %v1975 = vunpack.c.h.b16 %v1938
          %v1976 = vunpack.c.l.b16 %v1939
          %v1977 = vunpack.c.h.b16 %v1939
          %v1978 = vunpack.c.l.b16 %v1940
          %v1979 = vunpack.c.h.b16 %v1940
          %v1980 = vunpack.c.l.b16 %v1941
          %v1981 = vunpack.c.h.b16 %v1941
          %v1982 = vunpack.c.l.b16 %v1942
          %v1983 = vunpack.c.h.b16 %v1942
          %v1984 = vunpack.c.l.b16 %v1943
          %v1985 = vunpack.c.h.b16 %v1943
          %v1986 = vunpack.c.l.b16 %v1944
          %v1987 = vunpack.c.h.b16 %v1944
          %v1988 = vunpack.c.l.b16 %v1945
          %v1989 = vunpack.c.h.b16 %v1945
          %v1990 = vunpack.c.l.b16 %v1946
          %v1991 = vunpack.c.h.b16 %v1946
          %v1992 = vunpack.c.l.b16 %v1947
          %v1993 = vunpack.c.h.b16 %v1947
          %v1994 = vunpack.c.l.b16 %v1948
          %v1995 = vunpack.c.h.b16 %v1948
          %v1996 = vunpack.c.l.b16 %v1949
          %v1997 = vunpack.c.h.b16 %v1949
          %v1998 = vunpack.c.l.b16 %v1950
          %v1999 = vunpack.c.h.b16 %v1950
          %v2000 = vunpack.c.l.b16 %v1951
          %v2001 = vunpack.c.h.b16 %v1951
          %v2002 = vpack.c.b16 %v1970, %v1970
          %v2003 = vpack.c.b16 %v1971, %v1971
          %v2004 = vpack.c.b16 %v1972, %v1972
          %v2005 = vpack.c.b16 %v1973, %v1973
          %v2006 = vpack.c.b16 %v1974, %v1974
          %v2007 = vpack.c.b16 %v1975, %v1975
          %v2008 = vpack.c.b16 %v1976, %v1976
          %v2009 = vpack.c.b16 %v1977, %v1977
          %v2010 = vpack.c.b16 %v1978, %v1978
          %v2011 = vpack.c.b16 %v1979, %v1979
          %v2012 = vpack.c.b16 %v1980, %v1980
          %v2013 = vpack.c.b16 %v1981, %v1981
          %v2014 = vpack.c.b16 %v1982, %v1982
          %v2015 = vpack.c.b16 %v1983, %v1983
          %v2016 = vpack.c.b16 %v1984, %v1984
          %v2017 = vpack.c.b16 %v1985, %v1985
          %v2018 = vpack.c.b16 %v1986, %v1986
          %v2019 = vpack.c.b16 %v1987, %v1987
          %v2020 = vpack.c.b16 %v1988, %v1988
          %v2021 = vpack.c.b16 %v1989, %v1989
          %v2022 = vpack.c.b16 %v1990, %v1990
          %v2023 = vpack.c.b16 %v1991, %v1991
          %v2024 = vpack.c.b16 %v1992, %v1992
          %v2025 = vpack.c.b16 %v1993, %v1993
          %v2026 = vpack.c.b16 %v1994, %v1994
          %v2027 = vpack.c.b16 %v1995, %v1995
          %v2028 = vpack.c.b16 %v1996, %v1996
          %v2029 = vpack.c.b16 %v1997, %v1997
          %v2030 = vpack.c.b16 %v1998, %v1998
          %v2031 = vpack.c.b16 %v1999, %v1999
          %v2032 = vpack.c.b16 %v2000, %v2000
          %v2033 = vpack.c.b16 %v2001, %v2001
          %s2066 = sshra.s32 %s1953, 3
          %s2067 = sand.u32 %s1953, 7
          %s2068 = smul.addr %s2066, 4
          %s2069 = scalar_lea.vmem [#allocation3], %s2068
          %2070 = vst [vmem:[%s2069] sm:$0xf] %v2002
          %2071 = vst [vmem:[%s2069 + $0x4] sm:$0xf] %v2003
          %2072 = vst [vmem:[%s2069 + $0x8] sm:$0xf] %v2004
          %2073 = vst [vmem:[%s2069 + $0xc] sm:$0xf] %v2005
          %2074 = vst [vmem:[%s2069 + $0x10] sm:$0xf] %v2006
          %2075 = vst [vmem:[%s2069 + $0x14] sm:$0xf] %v2007
          %2076 = vst [vmem:[%s2069 + $0x18] sm:$0xf] %v2008
          %2077 = vst [vmem:[%s2069 + $0x1c] sm:$0xf] %v2009
          %2078 = vst [vmem:[%s2069 + $0x20] sm:$0xf] %v2010
          %2079 = vst [vmem:[%s2069 + $0x24] sm:$0xf] %v2011
          %2080 = vst [vmem:[%s2069 + $0x28] sm:$0xf] %v2012
          %2081 = vst [vmem:[%s2069 + $0x2c] sm:$0xf] %v2013
          %2082 = vst [vmem:[%s2069 + $0x30] sm:$0xf] %v2014
          %2083 = vst [vmem:[%s2069 + $0x34] sm:$0xf] %v2015
          %2084 = vst [vmem:[%s2069 + $0x38] sm:$0xf] %v2016
          %2085 = vst [vmem:[%s2069 + $0x3c] sm:$0xf] %v2017
          %2086 = vst [vmem:[%s2069 + $0x40] sm:$0xf] %v2018
          %2087 = vst [vmem:[%s2069 + $0x44] sm:$0xf] %v2019
          %2088 = vst [vmem:[%s2069 + $0x48] sm:$0xf] %v2020
          %2089 = vst [vmem:[%s2069 + $0x4c] sm:$0xf] %v2021
          %2090 = vst [vmem:[%s2069 + $0x50] sm:$0xf] %v2022
          %2091 = vst [vmem:[%s2069 + $0x54] sm:$0xf] %v2023
          %2092 = vst [vmem:[%s2069 + $0x58] sm:$0xf] %v2024
          %2093 = vst [vmem:[%s2069 + $0x5c] sm:$0xf] %v2025
          %2094 = vst [vmem:[%s2069 + $0x60] sm:$0xf] %v2026
          %2095 = vst [vmem:[%s2069 + $0x64] sm:$0xf] %v2027
          %2096 = vst [vmem:[%s2069 + $0x68] sm:$0xf] %v2028
          %2097 = vst [vmem:[%s2069 + $0x6c] sm:$0xf] %v2029
          %2098 = vst [vmem:[%s2069 + $0x70] sm:$0xf] %v2030
          %2099 = vst [vmem:[%s2069 + $0x74] sm:$0xf] %v2031
          %2100 = vst [vmem:[%s2069 + $0x78] sm:$0xf] %v2032
          %2101 = vst [vmem:[%s2069 + $0x7c] sm:$0xf] %v2033
          %v2102 = vld [vmem:[%s435] sm:$0xf]
          %v2105 = vunpack.c.l.s4 1983009808
          %v2106 = vunpack.c.0.s8 %v2105
          %v2107 = vlaneseq
          %v2108 = vshrl.u32 %v2107, 7
          %v2109 = vsub.s32 %v2106, %v2108
          %v2110 = vrot.slane %v2102, %v2109
          %v2111 = vcombine.high %v2110, %v2110
          %2114 = vmatprep.subr.bf16.mxu0 0
          %2115 = vmatpush1.bf16.msra.mxu0 %v1943
          %2116 = vmatprep.subr.bf16.mxu0 0
          %2117 = vmatpush1.bf16.msra.mxu0 %v1942
          %2118 = vmatprep.subr.bf16.mxu0 0
          %2119 = vmatpush1.bf16.msra.mxu0 %v1941
          %2120 = vmatprep.subr.bf16.mxu0 0
          %2121 = vmatpush1.bf16.msra.mxu0 %v1940
          %2122 = vmatprep.subr.bf16.mxu0 0
          %2123 = vmatpush1.bf16.msra.mxu0 %v1939
          %2124 = vmatprep.subr.bf16.mxu0 0
          %2125 = vmatpush1.bf16.msra.mxu0 %v1938
          %2126 = vmatprep.subr.bf16.mxu0 0
          %2127 = vmatpush1.bf16.msra.mxu0 %v1937
          %2128 = vmatprep.subr.bf16.mxu0 0
          %2129 = vmatpush1.bf16.msra.mxu0 %v1936
          %2130 = vmatprep.subr.bf16.mxu0 0
          %2131 = vmatpush2.bf16.msra.mxu0 %v1951
          %2132 = vmatprep.subr.bf16.mxu0 0
          %2133 = vmatpush2.bf16.msra.mxu0 %v1950
          %2134 = vmatprep.subr.bf16.mxu0 0
          %2135 = vmatpush2.bf16.msra.mxu0 %v1949
          %2136 = vmatprep.subr.bf16.mxu0 0
          %2137 = vmatpush2.bf16.msra.mxu0 %v1948
          %2138 = vmatprep.subr.bf16.mxu0 0
          %2139 = vmatpush2.bf16.msra.mxu0 %v1947
          %2140 = vmatprep.subr.bf16.mxu0 0
          %2141 = vmatpush2.bf16.msra.mxu0 %v1946
          %2142 = vmatprep.subr.bf16.mxu0 0
          %2143 = vmatpush2.bf16.msra.mxu0 %v1945
          %2144 = vmatprep.subr.bf16.mxu0 0
          %2145 = vmatpush2.bf16.msra.mxu0 %v1944
          %2146 = vmatprep.mubr.bf16.mxu0 %v2111
          %2147 = vmatmul.mubr.bf16.gmra.mxu0 %v2110
          %v2148 = vpop.f32.mrf.mxu0
          %v2149 = vadd.f32 0.0, %v2148
          %v2150 = vpop.f32.mrf.mxu0
          %v2151 = vpop.f32.mrf.mxu0
          %v2152 = vpop.f32.mrf.mxu0
          %2153 = vdwg.mxu0
          %2154 = vst [vmem:[%s443] sm:$0xf] %v2149
        $region72: #{graphsage_forward.1} parent=47 // pred_fallthru
          _
        %p2155 = scmp.lt.s32.totalorder %s25, 2
        %s2156 = scalar_select %p2155, %s25, 2
        %p2157 = scmp.lt.s32.totalorder %s26, 0
        %s2158 = scalar_select %p2157, %s26, 0
        %s2159 = sadd.s32 %s2158, %s2156
        %s2160 = smul.addr %s2159, 4
        %s2161 = scalar_lea.vmem %s7, %s2160
        // Predicated region
        $region73: #{graphsage_forward.1} parent=47 // pred_check
          %p2162 = pneg %p238
        $region74: #{graphsage_forward.1} parent=47 // pred_check_branch
          %2164 = sbr.rel (%p2162) target = $region76
        $region75: #{graphsage_forward.1} parent=47 // pred_region
          _
        $region76: #{graphsage_forward.1} parent=47 // pred_fallthru
          _
      $region48: #{graphsage_forward.1} parent=5 // pred_fallthru
        _
      %p2165 = scmp.le.s32.totalorder 2, %s15
      // Predicated region
      $region77: #{graphsage_forward.1} parent=5 // pred_check
        %p2166 = pneg %p2165
      $region78: #{graphsage_forward.1} parent=5 // pred_check_branch
        %2168 = sbr.rel (%p2166) target = $region80
      $region79: #{graphsage_forward.1} parent=5 // pred_region
        %s2169 = ssub.s32 %s15, 2
        // Predicated region
        $region81: #{graphsage_forward.1} parent=79 // pred_check
          %p2170 = pneg %p244
        $region82: #{graphsage_forward.1} parent=79 // pred_check_branch
          %2172 = sbr.rel (%p2170) target = $region84
        $region83: #{graphsage_forward.1} parent=79 // pred_region
          %p2173 = scmp.lt.s32.totalorder %s28, 2
          %s2174 = scalar_select %p2173, %s28, 2
          %p2175 = scmp.lt.s32.totalorder %s29, 0
          %s2176 = scalar_select %p2175, %s29, 0
          %s2177 = sadd.s32 %s2176, %s2174
          %s2178 = smul.addr %s2177, 4
          %s2179 = scalar_lea.vmem %s7, %s2178
        $region84: #{graphsage_forward.1} parent=79 // pred_fallthru
          _
      $region80: #{graphsage_forward.1} parent=5 // pred_fallthru
        _
    $region6: #{graphsage_forward.1} parent=1 // loop_footer
      %s19 = sadd.s32 1, %s15
    $region7: #{graphsage_forward.1} parent=1 // loop_footer_branch
      %14 = sbr.rel target = $region3
    $region8: #{graphsage_forward.1} parent=1 // loop_exit
      _
    %2180 = vsyncpa [#allocation5], 1
    %s2181 = scalar_lea.sflag [#allocation5], 1
    %2182 = vsyncpa %s2181, 1
    %2183 = vsyncpa [#allocation7], 1

</llo_original>
